<compile_context>
chip_gen: v6e
topology: v6e:2x2x1
jax: 0.10.0
libtpu: 0.0.40
codegen_flags: <defaults>
</compile_context>

<pallas_src>
import functools

import jax
import jax.numpy as jnp
import numpy as np
from jax.experimental import pallas as pl
from jax.experimental.pallas import tpu as pltpu

BN_EPS = 1e-5
MMD_KERNEL_MUL = 2.0   # repeated-squaring trick below assumes this is exactly 2
MMD_KERNEL_NUM = 5
LANE = 128


def _round_up(x, m):
    return ((x + m - 1) // m) * m


def _pick_hw_tile(hw, cap=2048):
    """Largest multiple of 128 that divides hw (capped); falls back to hw itself."""
    best = None
    t = LANE
    while t <= min(hw, cap):
        if hw % t == 0:
            best = t
        t += LANE
    return best if best is not None else hw


# ----------------------------------------------------------------------------
# Fused kernel: tiled backbone + (BN-folded) head + classifier + MMD loss
# ----------------------------------------------------------------------------
def fused_transfer_kernel(hw_total,
                          src_ref, tgt_ref, wct_ref, bc_ref,
                          w1_ref, b1_ref, w2_ref, b2_ref, w3_ref, b3_ref,
                          sign_ref, clf_ref, loss_ref, feat_acc):
    """One grid step = one pixel tile of every sample (source + target).

    src_ref/tgt_ref : (N, C, HW_TILE) f32   lane axis = pixels (lane-dense)
    wct / bc        : backbone 1x1-conv stand-in, (F, C) bf16 / (F, 1) f32
    w1 / b1         : fc_layers Linear + folded eval-BN, (F, WIDTH) bf16 / (1, WIDTH) f32
    w2 / b2         : bottleneck Linear + folded eval-BN, (WIDTH, BNECK) bf16 / (1, BNECK) f32
    w3 / b3         : classifier Linear, lane-padded, (BNECK, NCLS_PAD) bf16 / (1, NCLS_PAD) f32
    sign_ref        : (2N, 2N) +/-1 block mask encoding mean(XX + YY - XY - YX)
    clf_ref         : (N, NCLS_PAD) f32 output (source logits)
    loss_ref        : (1, 1)       f32 output (MMD transfer loss)
    feat_acc        : (2N, F)      f32 scratch, running sum of relu(conv) over pixels
    """
    j = pl.program_id(0)
    n_hw = pl.num_programs(0)
    n_src, _c_in, hw_tile = src_ref.shape

    @pl.when(j == 0)
    def _init():
        feat_acc[...] = jnp.zeros_like(feat_acc)

    wct = wct_ref[...]                          # (F, C) bf16
    bcol = bc_ref[...]                          # (F, 1) f32
    ones_row = jnp.ones((1, hw_tile), jnp.float32)

    def pooled_feat(x_cp):
        # (C, P) -> (1, F): 1x1 conv over channels (+bias, ReLU), summed over this tile's
        # pixels via a ones-row contraction so every op stays a plain rank-2 dot.
        y = jnp.dot(wct, x_cp.astype(jnp.bfloat16),
                    preferred_element_type=jnp.float32)                 # (F, P)
        y = jnp.maximum(y + bcol, 0.0)
        return jax.lax.dot_general(ones_row, y, (((1,), (1,)), ((), ())),
                                   preferred_element_type=jnp.float32)  # (1, F)

    # Static unroll over the (small) per-domain batch: all scratch indexing stays static.
    for s in range(n_src):
        feat_acc[s:s + 1, :] = feat_acc[s:s + 1, :] + pooled_feat(src_ref[s])
        r = n_src + s
        feat_acc[r:r + 1, :] = feat_acc[r:r + 1, :] + pooled_feat(tgt_ref[s])

    @pl.when(j == n_hw - 1)
    def _finalize():
        # Global average pool finishes here; head + MMD run exactly once per forward.
        feat = (feat_acc[...] * (1.0 / float(hw_total))).astype(jnp.bfloat16)   # (2N, F)

        # fc_layers: Linear (+ folded eval-BN) + ReLU
        h1 = jnp.dot(feat, w1_ref[...], preferred_element_type=jnp.float32) + b1_ref[...]
        h1 = jnp.maximum(h1, 0.0)                                               # (2N, WIDTH)
        # bottleneck: Linear (+ folded eval-BN) + ReLU + Dropout(eval = identity)
        h2 = jnp.dot(h1.astype(jnp.bfloat16), w2_ref[...],
                     preferred_element_type=jnp.float32) + b2_ref[...]
        h2 = jnp.maximum(h2, 0.0)                                               # (2N, BNECK) f32

        # classifier on the source half only (target logits are never used)
        clf_ref[...] = (jnp.dot(h2[:n_src].astype(jnp.bfloat16), w3_ref[...],
                                preferred_element_type=jnp.float32) + b3_ref[...])

        # ---- multi-bandwidth Gaussian MMD on bottleneck features (f32 math) ----
        z = h2                                                                  # (2N, D)
        g = jax.lax.dot_general(z, z, (((1,), (1,)), ((), ())),
                                preferred_element_type=jnp.float32)             # (2N, 2N)
        sq = jnp.sum(z * z, axis=-1, keepdims=True)                             # (2N, 1)
        d = jnp.maximum(sq + sq.T - 2.0 * g, 0.0)                               # clamp fp cancellation

        n2 = 2 * n_src
        total = jnp.sum(d, keepdims=True)                                       # (1, 1)
        bandwidth = jnp.maximum(total * (1.0 / float(n2 * n2 - n2)), 1e-12)     # epsilon floor
        bw_max = bandwidth * float(MMD_KERNEL_MUL ** (MMD_KERNEL_NUM - 1 - MMD_KERNEL_NUM // 2))
        # kernel_mul == 2  =>  exp(-d / bw_i) = t^(2^k)  with  t = exp(-d / bw_max)
        t = jnp.exp(-d * pl.reciprocal(bw_max, approx=True))
        ksum = t
        kpow = t
        for _ in range(MMD_KERNEL_NUM - 1):
            kpow = kpow * kpow
            ksum = ksum + kpow

        loss_ref[...] = (jnp.sum(ksum * sign_ref[...], keepdims=True)
                         * (1.0 / float(n_src * n_src)))


# ----------------------------------------------------------------------------
# Wrapper
# ----------------------------------------------------------------------------
@functools.partial(jax.jit, static_argnames=("num_class",))
def transfer_net_forward(prep, source_nchw, target_nchw, *, num_class):
    n, c, h, w = source_nchw.shape
    hw = h * w

    # Lane-dense layout: HW stays on the last (lane) axis; this reshape is free.
    src = source_nchw.reshape(n, c, hw)
    tgt = target_nchw.reshape(n, c, hw)

    hw_tile = _pick_hw_tile(hw)
    n_hw = hw // hw_tile

    feat_dim = prep["wct"].shape[0]
    ncls_pad = prep["w3"].shape[1]

    # +/-1 block mask for mean(XX + YY - XY - YX); trace-time constant (n is static).
    blk = np.ones((n, n), np.float32)
    sign = jnp.asarray(np.block([[blk, -blk], [-blk, blk]]))

    def full_spec(a):
        nd = a.ndim
        return pl.BlockSpec(a.shape, lambda j: (0,) * nd)

    x_spec = pl.BlockSpec((n, c, hw_tile), lambda j: (0, 0, j))

    clf_pad, loss = pl.pallas_call(
        functools.partial(fused_transfer_kernel, hw),
        out_shape=(jax.ShapeDtypeStruct((n, ncls_pad), jnp.float32),
                   jax.ShapeDtypeStruct((1, 1), jnp.float32)),
        grid=(n_hw,),
        in_specs=[
            x_spec, x_spec,
            full_spec(prep["wct"]), full_spec(prep["bc"]),
            full_spec(prep["w1"]), full_spec(prep["b1"]),
            full_spec(prep["w2"]), full_spec(prep["b2"]),
            full_spec(prep["w3"]), full_spec(prep["b3"]),
            full_spec(sign),
        ],
        out_specs=(pl.BlockSpec((n, ncls_pad), lambda j: (0, 0)),
                   pl.BlockSpec((1, 1), lambda j: (0, 0))),
        scratch_shapes=[pltpu.VMEM((2 * n, feat_dim), jnp.float32)],
        compiler_params=pltpu.CompilerParams(
            dimension_semantics=("arbitrary",),       # pool reduction feeds a cross-sample epilogue
            vmem_limit_bytes=32 * 1024 * 1024),
    )(src, tgt, prep["wct"], prep["bc"], prep["w1"], prep["b1"],
      prep["w2"], prep["b2"], prep["w3"], prep["b3"], sign)

    source_clf = clf_pad[:, :num_class]
    return source_clf, loss[0, 0]


# ----------------------------------------------------------------------------
# Parameter init (PyTorch-matching) and prep (BN folding + bf16 + lane padding)
# ----------------------------------------------------------------------------
def init_params(key, in_ch, feat_dim, width, bneck, num_class):
    ks = jax.random.split(key, 4)
    p = {}
    # backbone stand-in (synthetic deterministic weights)
    p["wc"] = 0.05 * jax.random.normal(ks[0], (in_ch, feat_dim), jnp.float32)
    p["bc"] = jnp.zeros((1, feat_dim), jnp.float32)
    # fc_layers[0]: weight ~ N(0, 0.005), bias = 0.1   (stored transposed: (in, out))
    p["w1"] = 0.005 * jax.random.normal(ks[1], (feat_dim, width), jnp.float32)
    p["b1"] = jnp.full((1, width), 0.1, jnp.float32)
    # fc_layers[1]: BatchNorm1d(width) default init, eval running stats
    p["g1"], p["be1"] = jnp.ones((1, width), jnp.float32), jnp.zeros((1, width), jnp.float32)
    p["m1"], p["v1"] = jnp.zeros((1, width), jnp.float32), jnp.ones((1, width), jnp.float32)
    # bottleneck_layer[0]: weight ~ N(0, 0.005), bias = 0.1
    p["w2"] = 0.005 * jax.random.normal(ks[2], (width, bneck), jnp.float32)
    p["b2"] = jnp.full((1, bneck), 0.1, jnp.float32)
    # bottleneck_layer[1]: BatchNorm1d(bneck)
    p["g2"], p["be2"] = jnp.ones((1, bneck), jnp.float32), jnp.zeros((1, bneck), jnp.float32)
    p["m2"], p["v2"] = jnp.zeros((1, bneck), jnp.float32), jnp.ones((1, bneck), jnp.float32)
    # classifier_layer[0]: weight ~ N(0, 0.01), bias = 0.0
    p["w3"] = 0.01 * jax.random.normal(ks[3], (bneck, num_class), jnp.float32)
    p["b3"] = jnp.zeros((1, num_class), jnp.float32)
    return p


def _fold_bn(w, b, gamma, beta, mean, var):
    scale = gamma * jax.lax.rsqrt(var + BN_EPS)          # (1, out)
    return w * scale, (b - mean) * scale + beta


def prepare_params(p):
    """Fold eval-BN into the Linears, cast matmul weights to bf16, lane-pad the classifier."""
    w1, b1 = _fold_bn(p["w1"], p["b1"], p["g1"], p["be1"], p["m1"], p["v1"])
    w2, b2 = _fold_bn(p["w2"], p["b2"], p["g2"], p["be2"], p["m2"], p["v2"])
    ncls = p["w3"].shape[1]
    ncls_pad = _round_up(ncls, LANE)
    w3 = jnp.pad(p["w3"], ((0, 0), (0, ncls_pad - ncls)))     # padded cols stay exactly 0
    b3 = jnp.pad(p["b3"], ((0, 0), (0, ncls_pad - ncls)))
    return {
        # backbone 1x1-conv stand-in, transposed so the conv output keeps HW on the lanes
        "wct": jnp.transpose(p["wc"]).astype(jnp.bfloat16),   # (F, C)
        "bc": jnp.transpose(p["bc"]),                         # (F, 1) f32
        # head matmul weights in bf16 (MXU-native); biases stay f32
        "w1": w1.astype(jnp.bfloat16), "b1": b1,
        "w2": w2.astype(jnp.bfloat16), "b2": b2,
        "w3": w3.astype(jnp.bfloat16), "b3": b3,
    }


if __name__ == "__main__":
    key = jax.random.PRNGKey(0)
    k_p, k_s, k_t = jax.random.split(key, 3)

    # small shapes consistent with the module's forward (NCHW inputs)
    N, C, H, W = 4, 4, 16, 16
    FEAT_DIM = 32                      # backbone output_num() stand-in
    WIDTH = 128                        # fc_layers width
    BNECK = 64                         # bottleneck_width
    NUM_CLASS = 8

    params = init_params(k_p, C, FEAT_DIM, WIDTH, BNECK, NUM_CLASS)
    prep = prepare_params(params)
    source = jax.random.normal(k_s, (N, C, H, W), jnp.float32)
    target = jax.random.normal(k_t, (N, C, H, W), jnp.float32)

    source_clf, transfer_loss = transfer_net_forward(prep, source, target, num_class=NUM_CLASS)
    jax.block_until_ready((source_clf, transfer_loss))

    assert source_clf.shape == (N, NUM_CLASS)
    assert transfer_loss.shape == ()
    assert bool(jnp.all(jnp.isfinite(source_clf))) and bool(jnp.isfinite(transfer_loss))
    print("KERNEL_OK")
</pallas_src>

<mosaic_0001>
module attributes {stable_mosaic.version = 11 : i64} {
  func.func @fused_transfer_kernel(%arg0: i32, %arg1: memref<4x4x256xf32, #tpu.memory_space<vmem>>, %arg2: memref<4x4x256xf32, #tpu.memory_space<vmem>>, %arg3: memref<32x4xbf16, #tpu.memory_space<vmem>>, %arg4: memref<32x1xf32, #tpu.memory_space<vmem>>, %arg5: memref<32x128xbf16, #tpu.memory_space<vmem>>, %arg6: memref<1x128xf32, #tpu.memory_space<vmem>>, %arg7: memref<128x64xbf16, #tpu.memory_space<vmem>>, %arg8: memref<1x64xf32, #tpu.memory_space<vmem>>, %arg9: memref<64x128xbf16, #tpu.memory_space<vmem>>, %arg10: memref<1x128xf32, #tpu.memory_space<vmem>>, %arg11: memref<8x8xf32, #tpu.memory_space<vmem>>, %arg12: memref<4x128xf32, #tpu.memory_space<vmem>>, %arg13: memref<1x1xf32, #tpu.memory_space<vmem>>, %arg14: memref<8x32xf32, #tpu.memory_space<vmem>>) attributes {dimension_semantics = [#tpu.dimension_semantics<arbitrary>], iteration_bounds = array<i64: 1>, scalar_prefetch = 0 : i64, scratch_operands = 1 : i64, tpu.core_type = #tpu.core_type<tc>, window_params = [{transform_indices = @transform_0, window_bounds = array<i64: 4, 4, 256>}, {transform_indices = @transform_1, window_bounds = array<i64: 4, 4, 256>}, {pipeline_mode = #tpu.pipeline_mode<synchronous>, transform_indices = @transform_2, window_bounds = array<i64: 32, 4>}, {pipeline_mode = #tpu.pipeline_mode<synchronous>, transform_indices = @transform_3, window_bounds = array<i64: 32, 1>}, {pipeline_mode = #tpu.pipeline_mode<synchronous>, transform_indices = @transform_4, window_bounds = array<i64: 32, 128>}, {pipeline_mode = #tpu.pipeline_mode<synchronous>, transform_indices = @transform_5, window_bounds = array<i64: 1, 128>}, {pipeline_mode = #tpu.pipeline_mode<synchronous>, transform_indices = @transform_6, window_bounds = array<i64: 128, 64>}, {pipeline_mode = #tpu.pipeline_mode<synchronous>, transform_indices = @transform_7, window_bounds = array<i64: 1, 64>}, {pipeline_mode = #tpu.pipeline_mode<synchronous>, transform_indices = @transform_8, window_bounds = array<i64: 64, 128>}, {pipeline_mode = #tpu.pipeline_mode<synchronous>, transform_indices = @transform_9, window_bounds = array<i64: 1, 128>}, {pipeline_mode = #tpu.pipeline_mode<synchronous>, transform_indices = @transform_10, window_bounds = array<i64: 8, 8>}, {pipeline_mode = #tpu.pipeline_mode<synchronous>, transform_indices = @transform_11, window_bounds = array<i64: 4, 128>}, {pipeline_mode = #tpu.pipeline_mode<synchronous>, transform_indices = @transform_12, window_bounds = array<i64: 1, 1>}]} {
    %c0_i32 = arith.constant 0 : i32
    %0 = arith.cmpi eq, %arg0, %c0_i32 : i32
    %1 = arith.extui %0 : i1 to i32
    %c0_i32_0 = arith.constant 0 : i32
    %2 = arith.cmpi ne, %1, %c0_i32_0 : i32
    scf.if %2 {
      %cst_79 = arith.constant 0.000000e+00 : f32
      %105 = vector.broadcast %cst_79 : f32 to vector<8x32xf32>
      %c0_80 = arith.constant 0 : index
      %c0_81 = arith.constant 0 : index
      %106 = vector.load %arg14[%c0_80, %c0_81] : memref<8x32xf32, #tpu.memory_space<vmem>>, vector<8x32xf32>
      tpu.vector_store %arg14[%c0_80, %c0_81], %105 {strides = array<i32>} : memref<8x32xf32, #tpu.memory_space<vmem>>, vector<8x32xf32>,
    } else {
    }
    %c0 = arith.constant 0 : index
    %c0_1 = arith.constant 0 : index
    %3 = vector.load %arg3[%c0, %c0_1] : memref<32x4xbf16, #tpu.memory_space<vmem>>, vector<32x4xbf16>
    %c0_2 = arith.constant 0 : index
    %c0_3 = arith.constant 0 : index
    %4 = vector.load %arg4[%c0_2, %c0_3] : memref<32x1xf32, #tpu.memory_space<vmem>>, vector<32x1xf32>
    %cst = arith.constant 1.000000e+00 : f32
    %5 = vector.broadcast %cst : f32 to vector<1x256xf32>
    %c0_4 = arith.constant 0 : index
    %c0_5 = arith.constant 0 : index
    %6 = vector.load %arg14[%c0_4, %c0_5] : memref<8x32xf32, #tpu.memory_space<vmem>>, vector<1x32xf32>
    %c0_6 = arith.constant 0 : index
    %c0_7 = arith.constant 0 : index
    %c0_8 = arith.constant 0 : index
    %7 = vector.load %arg1[%c0_6, %c0_7, %c0_8] : memref<4x4x256xf32, #tpu.memory_space<vmem>>, vector<1x4x256xf32>
    %8 = vector.shape_cast %7 : vector<1x4x256xf32> to vector<4x256xf32>
    %9 = arith.truncf %8 : vector<4x256xf32> to vector<4x256xbf16>
    %cst_9 = arith.constant dense<0.000000e+00> : vector<32x256xf32>
    %10 = tpu.matmul %3, %9, %cst_9 {dimension_numbers = #tpu.dot_dimension_numbers<[1], [0], [0], [1], [0, 0, 1, 1], [], []>} : vector<32x4xbf16>, vector<4x256xbf16>, vector<32x256xf32> -> vector<32x256xf32>
    %11 = vector.broadcast %4 : vector<32x1xf32> to vector<32x256xf32>
    %12 = arith.addf %10, %11 : vector<32x256xf32>
    %cst_10 = arith.constant 0.000000e+00 : f32
    %13 = vector.broadcast %cst_10 : f32 to vector<32x256xf32>
    %14 = arith.maximumf %12, %13 : vector<32x256xf32>
    %cst_11 = arith.constant dense<0.000000e+00> : vector<1x32xf32>
    %15 = tpu.matmul %5, %14, %cst_11 {dimension_numbers = #tpu.dot_dimension_numbers<[1], [1], [0], [0], [0, 0, 1, 0], [], []>} : vector<1x256xf32>, vector<32x256xf32>, vector<1x32xf32> -> vector<1x32xf32>
    %16 = arith.addf %6, %15 : vector<1x32xf32>
    %c0_12 = arith.constant 0 : index
    %c0_13 = arith.constant 0 : index
    %17 = vector.load %arg14[%c0_12, %c0_13] : memref<8x32xf32, #tpu.memory_space<vmem>>, vector<1x32xf32>
    tpu.vector_store %arg14[%c0_12, %c0_13], %16 {strides = array<i32>} : memref<8x32xf32, #tpu.memory_space<vmem>>, vector<1x32xf32>,
    %c4 = arith.constant 4 : index
    %c0_14 = arith.constant 0 : index
    %18 = vector.load %arg14[%c4, %c0_14] : memref<8x32xf32, #tpu.memory_space<vmem>>, vector<1x32xf32>
    %c0_15 = arith.constant 0 : index
    %c0_16 = arith.constant 0 : index
    %c0_17 = arith.constant 0 : index
    %19 = vector.load %arg2[%c0_15, %c0_16, %c0_17] : memref<4x4x256xf32, #tpu.memory_space<vmem>>, vector<1x4x256xf32>
    %20 = vector.shape_cast %19 : vector<1x4x256xf32> to vector<4x256xf32>
    %21 = arith.truncf %20 : vector<4x256xf32> to vector<4x256xbf16>
    %cst_18 = arith.constant dense<0.000000e+00> : vector<32x256xf32>
    %22 = tpu.matmul %3, %21, %cst_18 {dimension_numbers = #tpu.dot_dimension_numbers<[1], [0], [0], [1], [0, 0, 1, 1], [], []>} : vector<32x4xbf16>, vector<4x256xbf16>, vector<32x256xf32> -> vector<32x256xf32>
    %23 = vector.broadcast %4 : vector<32x1xf32> to vector<32x256xf32>
    %24 = arith.addf %22, %23 : vector<32x256xf32>
    %cst_19 = arith.constant 0.000000e+00 : f32
    %25 = vector.broadcast %cst_19 : f32 to vector<32x256xf32>
    %26 = arith.maximumf %24, %25 : vector<32x256xf32>
    %cst_20 = arith.constant dense<0.000000e+00> : vector<1x32xf32>
    %27 = tpu.matmul %5, %26, %cst_20 {dimension_numbers = #tpu.dot_dimension_numbers<[1], [1], [0], [0], [0, 0, 1, 0], [], []>} : vector<1x256xf32>, vector<32x256xf32>, vector<1x32xf32> -> vector<1x32xf32>
    %28 = arith.addf %18, %27 : vector<1x32xf32>
    %c4_21 = arith.constant 4 : index
    %c0_22 = arith.constant 0 : index
    %29 = vector.load %arg14[%c4_21, %c0_22] : memref<8x32xf32, #tpu.memory_space<vmem>>, vector<1x32xf32>
    tpu.vector_store %arg14[%c4_21, %c0_22], %28 {strides = array<i32>} : memref<8x32xf32, #tpu.memory_space<vmem>>, vector<1x32xf32>,
    %c1 = arith.constant 1 : index
    %c0_23 = arith.constant 0 : index
    %30 = vector.load %arg14[%c1, %c0_23] : memref<8x32xf32, #tpu.memory_space<vmem>>, vector<1x32xf32>
    %c1_24 = arith.constant 1 : index
    %c0_25 = arith.constant 0 : index
    %c0_26 = arith.constant 0 : index
    %31 = vector.load %arg1[%c1_24, %c0_25, %c0_26] : memref<4x4x256xf32, #tpu.memory_space<vmem>>, vector<1x4x256xf32>
    %32 = vector.shape_cast %31 : vector<1x4x256xf32> to vector<4x256xf32>
    %33 = arith.truncf %32 : vector<4x256xf32> to vector<4x256xbf16>
    %cst_27 = arith.constant dense<0.000000e+00> : vector<32x256xf32>
    %34 = tpu.matmul %3, %33, %cst_27 {dimension_numbers = #tpu.dot_dimension_numbers<[1], [0], [0], [1], [0, 0, 1, 1], [], []>} : vector<32x4xbf16>, vector<4x256xbf16>, vector<32x256xf32> -> vector<32x256xf32>
    %35 = vector.broadcast %4 : vector<32x1xf32> to vector<32x256xf32>
    %36 = arith.addf %34, %35 : vector<32x256xf32>
    %cst_28 = arith.constant 0.000000e+00 : f32
    %37 = vector.broadcast %cst_28 : f32 to vector<32x256xf32>
    %38 = arith.maximumf %36, %37 : vector<32x256xf32>
    %cst_29 = arith.constant dense<0.000000e+00> : vector<1x32xf32>
    %39 = tpu.matmul %5, %38, %cst_29 {dimension_numbers = #tpu.dot_dimension_numbers<[1], [1], [0], [0], [0, 0, 1, 0], [], []>} : vector<1x256xf32>, vector<32x256xf32>, vector<1x32xf32> -> vector<1x32xf32>
    %40 = arith.addf %30, %39 : vector<1x32xf32>
    %c1_30 = arith.constant 1 : index
    %c0_31 = arith.constant 0 : index
    %41 = vector.load %arg14[%c1_30, %c0_31] : memref<8x32xf32, #tpu.memory_space<vmem>>, vector<1x32xf32>
    tpu.vector_store %arg14[%c1_30, %c0_31], %40 {strides = array<i32>} : memref<8x32xf32, #tpu.memory_space<vmem>>, vector<1x32xf32>,
    %c5 = arith.constant 5 : index
    %c0_32 = arith.constant 0 : index
    %42 = vector.load %arg14[%c5, %c0_32] : memref<8x32xf32, #tpu.memory_space<vmem>>, vector<1x32xf32>
    %c1_33 = arith.constant 1 : index
    %c0_34 = arith.constant 0 : index
    %c0_35 = arith.constant 0 : index
    %43 = vector.load %arg2[%c1_33, %c0_34, %c0_35] : memref<4x4x256xf32, #tpu.memory_space<vmem>>, vector<1x4x256xf32>
    %44 = vector.shape_cast %43 : vector<1x4x256xf32> to vector<4x256xf32>
    %45 = arith.truncf %44 : vector<4x256xf32> to vector<4x256xbf16>
    %cst_36 = arith.constant dense<0.000000e+00> : vector<32x256xf32>
    %46 = tpu.matmul %3, %45, %cst_36 {dimension_numbers = #tpu.dot_dimension_numbers<[1], [0], [0], [1], [0, 0, 1, 1], [], []>} : vector<32x4xbf16>, vector<4x256xbf16>, vector<32x256xf32> -> vector<32x256xf32>
    %47 = vector.broadcast %4 : vector<32x1xf32> to vector<32x256xf32>
    %48 = arith.addf %46, %47 : vector<32x256xf32>
    %cst_37 = arith.constant 0.000000e+00 : f32
    %49 = vector.broadcast %cst_37 : f32 to vector<32x256xf32>
    %50 = arith.maximumf %48, %49 : vector<32x256xf32>
    %cst_38 = arith.constant dense<0.000000e+00> : vector<1x32xf32>
    %51 = tpu.matmul %5, %50, %cst_38 {dimension_numbers = #tpu.dot_dimension_numbers<[1], [1], [0], [0], [0, 0, 1, 0], [], []>} : vector<1x256xf32>, vector<32x256xf32>, vector<1x32xf32> -> vector<1x32xf32>
    %52 = arith.addf %42, %51 : vector<1x32xf32>
    %c5_39 = arith.constant 5 : index
    %c0_40 = arith.constant 0 : index
    %53 = vector.load %arg14[%c5_39, %c0_40] : memref<8x32xf32, #tpu.memory_space<vmem>>, vector<1x32xf32>
    tpu.vector_store %arg14[%c5_39, %c0_40], %52 {strides = array<i32>} : memref<8x32xf32, #tpu.memory_space<vmem>>, vector<1x32xf32>,
    %c2 = arith.constant 2 : index
    %c0_41 = arith.constant 0 : index
    %54 = vector.load %arg14[%c2, %c0_41] : memref<8x32xf32, #tpu.memory_space<vmem>>, vector<1x32xf32>
    %c2_42 = arith.constant 2 : index
    %c0_43 = arith.constant 0 : index
    %c0_44 = arith.constant 0 : index
    %55 = vector.load %arg1[%c2_42, %c0_43, %c0_44] : memref<4x4x256xf32, #tpu.memory_space<vmem>>, vector<1x4x256xf32>
    %56 = vector.shape_cast %55 : vector<1x4x256xf32> to vector<4x256xf32>
    %57 = arith.truncf %56 : vector<4x256xf32> to vector<4x256xbf16>
    %cst_45 = arith.constant dense<0.000000e+00> : vector<32x256xf32>
    %58 = tpu.matmul %3, %57, %cst_45 {dimension_numbers = #tpu.dot_dimension_numbers<[1], [0], [0], [1], [0, 0, 1, 1], [], []>} : vector<32x4xbf16>, vector<4x256xbf16>, vector<32x256xf32> -> vector<32x256xf32>
    %59 = vector.broadcast %4 : vector<32x1xf32> to vector<32x256xf32>
    %60 = arith.addf %58, %59 : vector<32x256xf32>
    %cst_46 = arith.constant 0.000000e+00 : f32
    %61 = vector.broadcast %cst_46 : f32 to vector<32x256xf32>
    %62 = arith.maximumf %60, %61 : vector<32x256xf32>
    %cst_47 = arith.constant dense<0.000000e+00> : vector<1x32xf32>
    %63 = tpu.matmul %5, %62, %cst_47 {dimension_numbers = #tpu.dot_dimension_numbers<[1], [1], [0], [0], [0, 0, 1, 0], [], []>} : vector<1x256xf32>, vector<32x256xf32>, vector<1x32xf32> -> vector<1x32xf32>
    %64 = arith.addf %54, %63 : vector<1x32xf32>
    %c2_48 = arith.constant 2 : index
    %c0_49 = arith.constant 0 : index
    %65 = vector.load %arg14[%c2_48, %c0_49] : memref<8x32xf32, #tpu.memory_space<vmem>>, vector<1x32xf32>
    tpu.vector_store %arg14[%c2_48, %c0_49], %64 {strides = array<i32>} : memref<8x32xf32, #tpu.memory_space<vmem>>, vector<1x32xf32>,
    %c6 = arith.constant 6 : index
    %c0_50 = arith.constant 0 : index
    %66 = vector.load %arg14[%c6, %c0_50] : memref<8x32xf32, #tpu.memory_space<vmem>>, vector<1x32xf32>
    %c2_51 = arith.constant 2 : index
    %c0_52 = arith.constant 0 : index
    %c0_53 = arith.constant 0 : index
    %67 = vector.load %arg2[%c2_51, %c0_52, %c0_53] : memref<4x4x256xf32, #tpu.memory_space<vmem>>, vector<1x4x256xf32>
    %68 = vector.shape_cast %67 : vector<1x4x256xf32> to vector<4x256xf32>
    %69 = arith.truncf %68 : vector<4x256xf32> to vector<4x256xbf16>
    %cst_54 = arith.constant dense<0.000000e+00> : vector<32x256xf32>
    %70 = tpu.matmul %3, %69, %cst_54 {dimension_numbers = #tpu.dot_dimension_numbers<[1], [0], [0], [1], [0, 0, 1, 1], [], []>} : vector<32x4xbf16>, vector<4x256xbf16>, vector<32x256xf32> -> vector<32x256xf32>
    %71 = vector.broadcast %4 : vector<32x1xf32> to vector<32x256xf32>
    %72 = arith.addf %70, %71 : vector<32x256xf32>
    %cst_55 = arith.constant 0.000000e+00 : f32
    %73 = vector.broadcast %cst_55 : f32 to vector<32x256xf32>
    %74 = arith.maximumf %72, %73 : vector<32x256xf32>
    %cst_56 = arith.constant dense<0.000000e+00> : vector<1x32xf32>
    %75 = tpu.matmul %5, %74, %cst_56 {dimension_numbers = #tpu.dot_dimension_numbers<[1], [1], [0], [0], [0, 0, 1, 0], [], []>} : vector<1x256xf32>, vector<32x256xf32>, vector<1x32xf32> -> vector<1x32xf32>
    %76 = arith.addf %66, %75 : vector<1x32xf32>
    %c6_57 = arith.constant 6 : index
    %c0_58 = arith.constant 0 : index
    %77 = vector.load %arg14[%c6_57, %c0_58] : memref<8x32xf32, #tpu.memory_space<vmem>>, vector<1x32xf32>
    tpu.vector_store %arg14[%c6_57, %c0_58], %76 {strides = array<i32>} : memref<8x32xf32, #tpu.memory_space<vmem>>, vector<1x32xf32>,
    %c3 = arith.constant 3 : index
    %c0_59 = arith.constant 0 : index
    %78 = vector.load %arg14[%c3, %c0_59] : memref<8x32xf32, #tpu.memory_space<vmem>>, vector<1x32xf32>
    %c3_60 = arith.constant 3 : index
    %c0_61 = arith.constant 0 : index
    %c0_62 = arith.constant 0 : index
    %79 = vector.load %arg1[%c3_60, %c0_61, %c0_62] : memref<4x4x256xf32, #tpu.memory_space<vmem>>, vector<1x4x256xf32>
    %80 = vector.shape_cast %79 : vector<1x4x256xf32> to vector<4x256xf32>
    %81 = arith.truncf %80 : vector<4x256xf32> to vector<4x256xbf16>
    %cst_63 = arith.constant dense<0.000000e+00> : vector<32x256xf32>
    %82 = tpu.matmul %3, %81, %cst_63 {dimension_numbers = #tpu.dot_dimension_numbers<[1], [0], [0], [1], [0, 0, 1, 1], [], []>} : vector<32x4xbf16>, vector<4x256xbf16>, vector<32x256xf32> -> vector<32x256xf32>
    %83 = vector.broadcast %4 : vector<32x1xf32> to vector<32x256xf32>
    %84 = arith.addf %82, %83 : vector<32x256xf32>
    %cst_64 = arith.constant 0.000000e+00 : f32
    %85 = vector.broadcast %cst_64 : f32 to vector<32x256xf32>
    %86 = arith.maximumf %84, %85 : vector<32x256xf32>
    %cst_65 = arith.constant dense<0.000000e+00> : vector<1x32xf32>
    %87 = tpu.matmul %5, %86, %cst_65 {dimension_numbers = #tpu.dot_dimension_numbers<[1], [1], [0], [0], [0, 0, 1, 0], [], []>} : vector<1x256xf32>, vector<32x256xf32>, vector<1x32xf32> -> vector<1x32xf32>
    %88 = arith.addf %78, %87 : vector<1x32xf32>
    %c3_66 = arith.constant 3 : index
    %c0_67 = arith.constant 0 : index
    %89 = vector.load %arg14[%c3_66, %c0_67] : memref<8x32xf32, #tpu.memory_space<vmem>>, vector<1x32xf32>
    tpu.vector_store %arg14[%c3_66, %c0_67], %88 {strides = array<i32>} : memref<8x32xf32, #tpu.memory_space<vmem>>, vector<1x32xf32>,
    %c7 = arith.constant 7 : index
    %c0_68 = arith.constant 0 : index
    %90 = vector.load %arg14[%c7, %c0_68] : memref<8x32xf32, #tpu.memory_space<vmem>>, vector<1x32xf32>
    %c3_69 = arith.constant 3 : index
    %c0_70 = arith.constant 0 : index
    %c0_71 = arith.constant 0 : index
    %91 = vector.load %arg2[%c3_69, %c0_70, %c0_71] : memref<4x4x256xf32, #tpu.memory_space<vmem>>, vector<1x4x256xf32>
    %92 = vector.shape_cast %91 : vector<1x4x256xf32> to vector<4x256xf32>
    %93 = arith.truncf %92 : vector<4x256xf32> to vector<4x256xbf16>
    %cst_72 = arith.constant dense<0.000000e+00> : vector<32x256xf32>
    %94 = tpu.matmul %3, %93, %cst_72 {dimension_numbers = #tpu.dot_dimension_numbers<[1], [0], [0], [1], [0, 0, 1, 1], [], []>} : vector<32x4xbf16>, vector<4x256xbf16>, vector<32x256xf32> -> vector<32x256xf32>
    %95 = vector.broadcast %4 : vector<32x1xf32> to vector<32x256xf32>
    %96 = arith.addf %94, %95 : vector<32x256xf32>
    %cst_73 = arith.constant 0.000000e+00 : f32
    %97 = vector.broadcast %cst_73 : f32 to vector<32x256xf32>
    %98 = arith.maximumf %96, %97 : vector<32x256xf32>
    %cst_74 = arith.constant dense<0.000000e+00> : vector<1x32xf32>
    %99 = tpu.matmul %5, %98, %cst_74 {dimension_numbers = #tpu.dot_dimension_numbers<[1], [1], [0], [0], [0, 0, 1, 0], [], []>} : vector<1x256xf32>, vector<32x256xf32>, vector<1x32xf32> -> vector<1x32xf32>
    %100 = arith.addf %90, %99 : vector<1x32xf32>
    %c7_75 = arith.constant 7 : index
    %c0_76 = arith.constant 0 : index
    %101 = vector.load %arg14[%c7_75, %c0_76] : memref<8x32xf32, #tpu.memory_space<vmem>>, vector<1x32xf32>
    tpu.vector_store %arg14[%c7_75, %c0_76], %100 {strides = array<i32>} : memref<8x32xf32, #tpu.memory_space<vmem>>, vector<1x32xf32>,
    %c0_i32_77 = arith.constant 0 : i32
    %102 = arith.cmpi eq, %arg0, %c0_i32_77 : i32
    %103 = arith.extui %102 : i1 to i32
    %c0_i32_78 = arith.constant 0 : i32
    %104 = arith.cmpi ne, %103, %c0_i32_78 : i32
    scf.if %104 {
      %c0_79 = arith.constant 0 : index
      %c0_80 = arith.constant 0 : index
      %105 = vector.load %arg14[%c0_79, %c0_80] : memref<8x32xf32, #tpu.memory_space<vmem>>, vector<8x32xf32>
      %cst_81 = arith.constant 3.906250e-03 : f32
      %106 = vector.broadcast %cst_81 : f32 to vector<8x32xf32>
      %107 = arith.mulf %105, %106 : vector<8x32xf32>
      %108 = arith.truncf %107 : vector<8x32xf32> to vector<8x32xbf16>
      %c0_82 = arith.constant 0 : index
      %c0_83 = arith.constant 0 : index
      %109 = vector.load %arg5[%c0_82, %c0_83] : memref<32x128xbf16, #tpu.memory_space<vmem>>, vector<32x128xbf16>
      %cst_84 = arith.constant dense<0.000000e+00> : vector<8x128xf32>
      %110 = tpu.matmul %108, %109, %cst_84 {dimension_numbers = #tpu.dot_dimension_numbers<[1], [0], [0], [1], [0, 0, 1, 1], [], []>} : vector<8x32xbf16>, vector<32x128xbf16>, vector<8x128xf32> -> vector<8x128xf32>
      %c0_85 = arith.constant 0 : index
      %c0_86 = arith.constant 0 : index
      %111 = vector.load %arg6[%c0_85, %c0_86] : memref<1x128xf32, #tpu.memory_space<vmem>>, vector<1x128xf32>
      %112 = vector.broadcast %111 : vector<1x128xf32> to vector<8x128xf32>
      %113 = arith.addf %110, %112 : vector<8x128xf32>
      %cst_87 = arith.constant 0.000000e+00 : f32
      %114 = vector.broadcast %cst_87 : f32 to vector<8x128xf32>
      %115 = arith.maximumf %113, %114 : vector<8x128xf32>
      %116 = arith.truncf %115 : vector<8x128xf32> to vector<8x128xbf16>
      %c0_88 = arith.constant 0 : index
      %c0_89 = arith.constant 0 : index
      %117 = vector.load %arg7[%c0_88, %c0_89] : memref<128x64xbf16, #tpu.memory_space<vmem>>, vector<128x64xbf16>
      %cst_90 = arith.constant dense<0.000000e+00> : vector<8x64xf32>
      %118 = tpu.matmul %116, %117, %cst_90 {dimension_numbers = #tpu.dot_dimension_numbers<[1], [0], [0], [1], [0, 0, 1, 1], [], []>} : vector<8x128xbf16>, vector<128x64xbf16>, vector<8x64xf32> -> vector<8x64xf32>
      %c0_91 = arith.constant 0 : index
      %c0_92 = arith.constant 0 : index
      %119 = vector.load %arg8[%c0_91, %c0_92] : memref<1x64xf32, #tpu.memory_space<vmem>>, vector<1x64xf32>
      %120 = vector.broadcast %119 : vector<1x64xf32> to vector<8x64xf32>
      %121 = arith.addf %118, %120 : vector<8x64xf32>
      %cst_93 = arith.constant 0.000000e+00 : f32
      %122 = vector.broadcast %cst_93 : f32 to vector<8x64xf32>
      %123 = arith.maximumf %121, %122 : vector<8x64xf32>
      %124 = vector.extract_strided_slice %123 {offsets = [0, 0], sizes = [4, 64], strides = [1, 1]} : vector<8x64xf32> to vector<4x64xf32>
      %125 = arith.truncf %124 : vector<4x64xf32> to vector<4x64xbf16>
      %c0_94 = arith.constant 0 : index
      %c0_95 = arith.constant 0 : index
      %126 = vector.load %arg9[%c0_94, %c0_95] : memref<64x128xbf16, #tpu.memory_space<vmem>>, vector<64x128xbf16>
      %cst_96 = arith.constant dense<0.000000e+00> : vector<4x128xf32>
      %127 = tpu.matmul %125, %126, %cst_96 {dimension_numbers = #tpu.dot_dimension_numbers<[1], [0], [0], [1], [0, 0, 1, 1], [], []>} : vector<4x64xbf16>, vector<64x128xbf16>, vector<4x128xf32> -> vector<4x128xf32>
      %c0_97 = arith.constant 0 : index
      %c0_98 = arith.constant 0 : index
      %128 = vector.load %arg10[%c0_97, %c0_98] : memref<1x128xf32, #tpu.memory_space<vmem>>, vector<1x128xf32>
      %129 = vector.broadcast %128 : vector<1x128xf32> to vector<4x128xf32>
      %130 = arith.addf %127, %129 : vector<4x128xf32>
      %c0_99 = arith.constant 0 : index
      %c0_100 = arith.constant 0 : index
      %131 = vector.load %arg12[%c0_99, %c0_100] : memref<4x128xf32, #tpu.memory_space<vmem>>, vector<4x128xf32>
      tpu.vector_store %arg12[%c0_99, %c0_100], %130 {strides = array<i32>} : memref<4x128xf32, #tpu.memory_space<vmem>>, vector<4x128xf32>,
      %cst_101 = arith.constant dense<0.000000e+00> : vector<8x8xf32>
      %132 = tpu.matmul %123, %123, %cst_101 {dimension_numbers = #tpu.dot_dimension_numbers<[1], [1], [0], [0], [0, 0, 1, 0], [], []>} : vector<8x64xf32>, vector<8x64xf32>, vector<8x8xf32> -> vector<8x8xf32>
      %133 = arith.mulf %123, %123 : vector<8x64xf32>
      %cst_102 = arith.constant dense<0.000000e+00> : vector<8xf32>
      %134 = vector.multi_reduction <add>, %133, %cst_102 [1] : vector<8x64xf32> to vector<8xf32>
      %135 = vector.shape_cast %134 : vector<8xf32> to vector<8x1xf32>
      %136 = tpu.transpose %135, [1, 0] : vector<8x1xf32> -> vector<1x8xf32>
      %137 = vector.broadcast %135 : vector<8x1xf32> to vector<8x8xf32>
      %138 = vector.broadcast %136 : vector<1x8xf32> to vector<8x8xf32>
      %139 = arith.addf %137, %138 : vector<8x8xf32>
      %cst_103 = arith.constant 2.000000e+00 : f32
      %140 = vector.broadcast %cst_103 : f32 to vector<8x8xf32>
      %141 = arith.mulf %140, %132 : vector<8x8xf32>
      %142 = arith.subf %139, %141 : vector<8x8xf32>
      %cst_104 = arith.constant 0.000000e+00 : f32
      %143 = vector.broadcast %cst_104 : f32 to vector<8x8xf32>
      %144 = arith.maximumf %142, %143 : vector<8x8xf32>
      %145 = vector.shape_cast %144 : vector<8x8xf32> to vector<1x8x8xf32>
      %cst_105 = arith.constant dense<0.000000e+00> : vector<1xf32>
      %146 = vector.multi_reduction <add>, %145, %cst_105 [1, 2] : vector<1x8x8xf32> to vector<1xf32>
      %147 = vector.shape_cast %146 : vector<1xf32> to vector<1x1x1xf32>
      %148 = vector.extract %147[0, 0, 0] : f32 from vector<1x1x1xf32>
      %149 = vector.broadcast %148 : f32 to vector<1x1xf32>
      %cst_106 = arith.constant 0.0178571437 : f32
      %150 = vector.broadcast %cst_106 : f32 to vector<1x1xf32>
      %151 = arith.mulf %149, %150 : vector<1x1xf32>
      %cst_107 = arith.constant 9.99999996E-13 : f32
      %152 = vector.broadcast %cst_107 : f32 to vector<1x1xf32>
      %153 = arith.maximumf %151, %152 : vector<1x1xf32>
      %cst_108 = arith.constant 4.000000e+00 : f32
      %154 = vector.broadcast %cst_108 : f32 to vector<1x1xf32>
      %155 = arith.mulf %153, %154 : vector<1x1xf32>
      %cst_109 = arith.constant 0.000000e+00 : f32
      %156 = vector.broadcast %cst_109 : f32 to vector<8x8xf32>
      %157 = arith.subf %156, %144 : vector<8x8xf32>
      %158 = tpu.reciprocal %155 {approx = true} : vector<1x1xf32> -> vector<1x1xf32>
      %159 = vector.broadcast %158 : vector<1x1xf32> to vector<8x8xf32>
      %160 = arith.mulf %157, %159 : vector<8x8xf32>
      %161 = math.exp %160 : vector<8x8xf32>
      %162 = arith.mulf %161, %161 : vector<8x8xf32>
      %163 = arith.addf %161, %162 : vector<8x8xf32>
      %164 = arith.mulf %162, %162 : vector<8x8xf32>
      %165 = arith.addf %163, %164 : vector<8x8xf32>
      %166 = arith.mulf %164, %164 : vector<8x8xf32>
      %167 = arith.addf %165, %166 : vector<8x8xf32>
      %168 = arith.mulf %166, %166 : vector<8x8xf32>
      %169 = arith.addf %167, %168 : vector<8x8xf32>
      %c0_110 = arith.constant 0 : index
      %c0_111 = arith.constant 0 : index
      %170 = vector.load %arg11[%c0_110, %c0_111] : memref<8x8xf32, #tpu.memory_space<vmem>>, vector<8x8xf32>
      %171 = arith.mulf %169, %170 : vector<8x8xf32>
      %172 = vector.shape_cast %171 : vector<8x8xf32> to vector<1x8x8xf32>
      %cst_112 = arith.constant dense<0.000000e+00> : vector<1xf32>
      %173 = vector.multi_reduction <add>, %172, %cst_112 [1, 2] : vector<1x8x8xf32> to vector<1xf32>
      %174 = vector.shape_cast %173 : vector<1xf32> to vector<1x1x1xf32>
      %175 = vector.extract %174[0, 0, 0] : f32 from vector<1x1x1xf32>
      %176 = vector.broadcast %175 : f32 to vector<1x1xf32>
      %cst_113 = arith.constant 6.250000e-02 : f32
      %177 = vector.broadcast %cst_113 : f32 to vector<1x1xf32>
      %178 = arith.mulf %176, %177 : vector<1x1xf32>
      %c0_114 = arith.constant 0 : index
      %c0_115 = arith.constant 0 : index
      %179 = vector.load %arg13[%c0_114, %c0_115] : memref<1x1xf32, #tpu.memory_space<vmem>>, vector<1x1xf32>
      tpu.vector_store %arg13[%c0_114, %c0_115], %178 {strides = array<i32>} : memref<1x1xf32, #tpu.memory_space<vmem>>, vector<1x1xf32>,
    } else {
    }
    return
  }
  func.func @transform_0(%arg0: i32) -> (i32, i32, i32) {
    %c0_i32 = arith.constant 0 : i32
    %c0_i32_0 = arith.constant 0 : i32
    %c0_i32_1 = arith.constant 0 : i32
    return %c0_i32, %c0_i32_0, %arg0 : i32, i32, i32
  }
  func.func @transform_1(%arg0: i32) -> (i32, i32, i32) {
    %c0_i32 = arith.constant 0 : i32
    %c0_i32_0 = arith.constant 0 : i32
    %c0_i32_1 = arith.constant 0 : i32
    return %c0_i32, %c0_i32_0, %arg0 : i32, i32, i32
  }
  func.func @transform_2(%arg0: i32) -> (i32, i32) {
    %c0_i32 = arith.constant 0 : i32
    %c0_i32_0 = arith.constant 0 : i32
    %c0_i32_1 = arith.constant 0 : i32
    return %c0_i32, %c0_i32_0 : i32, i32
  }
  func.func @transform_3(%arg0: i32) -> (i32, i32) {
    %c0_i32 = arith.constant 0 : i32
    %c0_i32_0 = arith.constant 0 : i32
    %c0_i32_1 = arith.constant 0 : i32
    return %c0_i32, %c0_i32_0 : i32, i32
  }
  func.func @transform_4(%arg0: i32) -> (i32, i32) {
    %c0_i32 = arith.constant 0 : i32
    %c0_i32_0 = arith.constant 0 : i32
    %c0_i32_1 = arith.constant 0 : i32
    return %c0_i32, %c0_i32_0 : i32, i32
  }
  func.func @transform_5(%arg0: i32) -> (i32, i32) {
    %c0_i32 = arith.constant 0 : i32
    %c0_i32_0 = arith.constant 0 : i32
    %c0_i32_1 = arith.constant 0 : i32
    return %c0_i32, %c0_i32_0 : i32, i32
  }
  func.func @transform_6(%arg0: i32) -> (i32, i32) {
    %c0_i32 = arith.constant 0 : i32
    %c0_i32_0 = arith.constant 0 : i32
    %c0_i32_1 = arith.constant 0 : i32
    return %c0_i32, %c0_i32_0 : i32, i32
  }
  func.func @transform_7(%arg0: i32) -> (i32, i32) {
    %c0_i32 = arith.constant 0 : i32
    %c0_i32_0 = arith.constant 0 : i32
    %c0_i32_1 = arith.constant 0 : i32
    return %c0_i32, %c0_i32_0 : i32, i32
  }
  func.func @transform_8(%arg0: i32) -> (i32, i32) {
    %c0_i32 = arith.constant 0 : i32
    %c0_i32_0 = arith.constant 0 : i32
    %c0_i32_1 = arith.constant 0 : i32
    return %c0_i32, %c0_i32_0 : i32, i32
  }
  func.func @transform_9(%arg0: i32) -> (i32, i32) {
    %c0_i32 = arith.constant 0 : i32
    %c0_i32_0 = arith.constant 0 : i32
    %c0_i32_1 = arith.constant 0 : i32
    return %c0_i32, %c0_i32_0 : i32, i32
  }
  func.func @transform_10(%arg0: i32) -> (i32, i32) {
    %c0_i32 = arith.constant 0 : i32
    %c0_i32_0 = arith.constant 0 : i32
    %c0_i32_1 = arith.constant 0 : i32
    return %c0_i32, %c0_i32_0 : i32, i32
  }
  func.func @transform_11(%arg0: i32) -> (i32, i32) {
    %c0_i32 = arith.constant 0 : i32
    %c0_i32_0 = arith.constant 0 : i32
    %c0_i32_1 = arith.constant 0 : i32
    return %c0_i32, %c0_i32_0 : i32, i32
  }
  func.func @transform_12(%arg0: i32) -> (i32, i32) {
    %c0_i32 = arith.constant 0 : i32
    %c0_i32_0 = arith.constant 0 : i32
    %c0_i32_1 = arith.constant 0 : i32
    return %c0_i32, %c0_i32_0 : i32, i32
  }
}

</mosaic_0001>

<llo_original>
// kernel: transfer_net_forward.1
$region0: #{transfer_net_forward.1}
  #allocation0 [shape = 'u32[]', space=smem, size = 0x4, offset = 0x4, fixed_abs, tag = 'smem constant byte address 0x4 - core index']
  #allocation1 [shape = 'u32[144,128]{1,0:T(1,128)}', space=vmem, size = 0x12000, scoped, tag = 'internal scratch']
  #allocation2 [shape = 'f32[8,32]{1,0:T(8,128)}', space=vmem, size = 0x1000, scoped, tag = 'scratch operand']
  %s0 = inlined_call_operand.vmem [shape: f32[4,4,256], index: 0, kind: input, shape index: {}]
  %s1 = inlined_call_operand.vmem [shape: f32[4,4,256], index: 1, kind: input, shape index: {}]
  %s2 = inlined_call_operand.vmem [shape: bf16[32,4], index: 2, kind: input, shape index: {}]
  %s3 = inlined_call_operand.vmem [shape: f32[32,1], index: 3, kind: input, shape index: {}]
  %s4 = inlined_call_operand.vmem [shape: bf16[32,128], index: 4, kind: input, shape index: {}]
  %s5 = inlined_call_operand.vmem [shape: f32[1,128], index: 5, kind: input, shape index: {}]
  %s6 = inlined_call_operand.vmem [shape: bf16[128,64], index: 6, kind: input, shape index: {}]
  %s7 = inlined_call_operand.vmem [shape: f32[1,64], index: 7, kind: input, shape index: {}]
  %s8 = inlined_call_operand.vmem [shape: bf16[64,128], index: 8, kind: input, shape index: {}]
  %s9 = inlined_call_operand.vmem [shape: f32[1,128], index: 9, kind: input, shape index: {}]
  %s10 = inlined_call_operand.vmem [shape: f32[8,8], index: 10, kind: input, shape index: {}]
  %s11 = inlined_call_operand.hbm [shape: f32[4,128], index: 11, kind: output, shape index: {0}]
  %s12 = inlined_call_operand.hbm [shape: f32[1,1], index: 12, kind: output, shape index: {1}]
  %13 = xla_tuple %s11, %s12
  %s14 = sld [smem:[#allocation0]]
  $region70: #{transfer_net_forward.1} parent=0
    _
  %s16 = ssub.s32 1, %s14
  %s17 = scalar_select 0, %s16, %s14
  $region1: #{transfer_net_forward.1} parent=0
    #allocation3 [shape = 'u8[2048]{0}', space=vmem, size = 0x800, scoped, tag = 'output window, operand 0, single buffered']
    #allocation4 [shape = 's32[1]{0}', space=sflag, size = 0x4, scoped, tag = 'scoped memory for transfer_net_forward.1']
    #allocation5 [shape = 'u8[512]{0}', space=vmem, size = 0x400, scoped, tag = 'output window, operand 1, single buffered']
    #allocation6 [shape = 's32[1]{0}', space=sflag, size = 0x4, scoped, tag = 'scoped memory for transfer_net_forward.1']
    %18 = vsyncpa [#allocation4], 0
    %19 = vsyncpa [#allocation6], 0
    // Predicated region
    $region2: #{transfer_net_forward.1} parent=1 // pred_check
      _
    $region3: #{transfer_net_forward.1} parent=1 // pred_check_branch
      %21 = sbr.rel (0) target = $region5
    $region4: #{transfer_net_forward.1} parent=1 // pred_region
      _
    $region5: #{transfer_net_forward.1} parent=1 // pred_fallthru
      _
    // Predicated region
    $region6: #{transfer_net_forward.1} parent=1 // pred_check
      _
    $region7: #{transfer_net_forward.1} parent=1 // pred_check_branch
      %23 = sbr.rel (0) target = $region9
    $region8: #{transfer_net_forward.1} parent=1 // pred_region
      _
    $region9: #{transfer_net_forward.1} parent=1 // pred_fallthru
      _
    // Predicated region
    $region10: #{transfer_net_forward.1} parent=1 // pred_check
      _
    $region11: #{transfer_net_forward.1} parent=1 // pred_check_branch
      %25 = sbr.rel (0) target = $region13
    $region12: #{transfer_net_forward.1} parent=1 // pred_region
      _
    $region13: #{transfer_net_forward.1} parent=1 // pred_fallthru
      _
    // Predicated region
    $region14: #{transfer_net_forward.1} parent=1 // pred_check
      _
    $region15: #{transfer_net_forward.1} parent=1 // pred_check_branch
      %27 = sbr.rel (0) target = $region17
    $region16: #{transfer_net_forward.1} parent=1 // pred_region
      _
    $region17: #{transfer_net_forward.1} parent=1 // pred_fallthru
      _
    // Predicated region
    $region18: #{transfer_net_forward.1} parent=1 // pred_check
      _
    $region19: #{transfer_net_forward.1} parent=1 // pred_check_branch
      %29 = sbr.rel (0) target = $region21
    $region20: #{transfer_net_forward.1} parent=1 // pred_region
      _
    $region21: #{transfer_net_forward.1} parent=1 // pred_fallthru
      _
    // Predicated region
    $region22: #{transfer_net_forward.1} parent=1 // pred_check
      _
    $region23: #{transfer_net_forward.1} parent=1 // pred_check_branch
      %31 = sbr.rel (0) target = $region25
    $region24: #{transfer_net_forward.1} parent=1 // pred_region
      _
    $region25: #{transfer_net_forward.1} parent=1 // pred_fallthru
      _
    // Predicated region
    $region26: #{transfer_net_forward.1} parent=1 // pred_check
      _
    $region27: #{transfer_net_forward.1} parent=1 // pred_check_branch
      %33 = sbr.rel (0) target = $region29
    $region28: #{transfer_net_forward.1} parent=1 // pred_region
      _
    $region29: #{transfer_net_forward.1} parent=1 // pred_fallthru
      _
    // Predicated region
    $region30: #{transfer_net_forward.1} parent=1 // pred_check
      _
    $region31: #{transfer_net_forward.1} parent=1 // pred_check_branch
      %35 = sbr.rel (0) target = $region33
    $region32: #{transfer_net_forward.1} parent=1 // pred_region
      _
    $region33: #{transfer_net_forward.1} parent=1 // pred_fallthru
      _
    // Predicated region
    $region34: #{transfer_net_forward.1} parent=1 // pred_check
      _
    $region35: #{transfer_net_forward.1} parent=1 // pred_check_branch
      %37 = sbr.rel (0) target = $region37
    $region36: #{transfer_net_forward.1} parent=1 // pred_region
      _
    $region37: #{transfer_net_forward.1} parent=1 // pred_fallthru
      _
    // Predicated region
    $region38: #{transfer_net_forward.1} parent=1 // pred_check
      _
    $region39: #{transfer_net_forward.1} parent=1 // pred_check_branch
      %39 = sbr.rel (0) target = $region41
    $region40: #{transfer_net_forward.1} parent=1 // pred_region
      _
    $region41: #{transfer_net_forward.1} parent=1 // pred_fallthru
      _
    // Predicated region
    $region42: #{transfer_net_forward.1} parent=1 // pred_check
      _
    $region43: #{transfer_net_forward.1} parent=1 // pred_check_branch
      %41 = sbr.rel (0) target = $region45
    $region44: #{transfer_net_forward.1} parent=1 // pred_region
      _
    $region45: #{transfer_net_forward.1} parent=1 // pred_fallthru
      _
    %p43 = scmp.eq.s32.totalorder 0, 0
    // Predicated region
    $region46: #{transfer_net_forward.1} parent=1 // pred_check
      %p44 = pneg %p43
    $region47: #{transfer_net_forward.1} parent=1 // pred_check_branch
      %46 = sbr.rel (%p44) target = $region49
    $region48: #{transfer_net_forward.1} parent=1 // pred_region
      %vm47 = vcmask 261120
      %48 = vst.msk [vmem:[#allocation2] sm:$0xff] %vm47, 0.0
    $region49: #{transfer_net_forward.1} parent=1 // pred_fallthru
      _
    %v49 = vld [vmem:[%s2] sm:$0xf]
    %v50 = vld [vmem:[%s2 + $0x4] sm:$0xf]
    %v51 = vld [vmem:[%s2 + $0x8] sm:$0xf]
    %v52 = vld [vmem:[%s2 + $0xc] sm:$0xf]
    %v53 = vld [vmem:[%s3] sm:$0xff]
    %v54 = vld [vmem:[%s3 + $0x8] sm:$0xff]
    %v55 = vld [vmem:[%s3 + $0x10] sm:$0xff]
    %v56 = vld [vmem:[%s3 + $0x18] sm:$0xff]
    %v57 = vld [vmem:[#allocation2] sm:$0x1]
    %v58 = vld [vmem:[%s0] sm:$0xff]
    %v60 = vcombine.high %v58, %v58
    %v62 = vpack.c.bf16 %v58, %v58
    %v63 = vpack.c.bf16 %v60, %v60
    %65 = vset.pattern.permute.xlu0 0
    %66 = vperm.xlu0 %65, %v53
    %v67 = vpop.permute.xlu0 %66
    %70 = vset.pattern.permute.xlu0 0
    %71 = vperm.xlu0 %70, %v54
    %v72 = vpop.permute.xlu0 %71
    %75 = vset.pattern.permute.xlu0 0
    %76 = vperm.xlu0 %75, %v55
    %v77 = vpop.permute.xlu0 %76
    %80 = vset.pattern.permute.xlu0 0
    %81 = vperm.xlu0 %80, %v56
    %v82 = vpop.permute.xlu0 %81
    %v88 = vunpack.c.l.b16 %v49
    %v89 = vunpack.c.l.b16 %v50
    %v90 = vunpack.c.l.b16 %v51
    %v91 = vunpack.c.l.b16 %v52
    %v92 = vpack.c.b16 %v89, %v88
    %v93 = vpack.c.b16 %v91, %v90
    %vm94 = vcmask 31744
    %v96 = vsel %vm94, %v92, 0
    %v99 = vsel %vm94, %v93, 0
    %vm101 = vcmask 1041408
    %v103 = vsel %vm101, %v62, 0
    %v106 = vsel %vm101, %v63, 0
    %108 = vmatprep.subr.bf16.mxu0 0
    %109 = vmatpush1.bf16.msra.mxu0 0
    %110 = vmatprep.subr.bf16.mxu0 0
    %111 = vmatpush1.bf16.msra.mxu0 0
    %112 = vmatprep.subr.bf16.mxu0 0
    %113 = vmatpush1.bf16.msra.mxu0 0
    %114 = vmatprep.subr.bf16.mxu0 0
    %115 = vmatpush1.bf16.msra.mxu0 0
    %116 = vmatprep.subr.bf16.mxu0 0
    %117 = vmatpush1.bf16.msra.mxu0 0
    %118 = vmatprep.subr.bf16.mxu0 0
    %119 = vmatpush1.bf16.msra.mxu0 0
    %120 = vmatprep.subr.bf16.mxu0 0
    %121 = vmatpush1.bf16.msra.mxu0 0
    %122 = vmatprep.subr.bf16.mxu0 %v106
    %123 = vmatpush1.bf16.msra.mxu0 %v103
    %124 = vmatprep.subr.bf16.mxu0 0
    %125 = vmatpush2.bf16.msra.mxu0 0
    %126 = vmatprep.subr.bf16.mxu0 0
    %127 = vmatpush2.bf16.msra.mxu0 0
    %128 = vmatprep.subr.bf16.mxu0 0
    %129 = vmatpush2.bf16.msra.mxu0 0
    %130 = vmatprep.subr.bf16.mxu0 0
    %131 = vmatpush2.bf16.msra.mxu0 0
    %132 = vmatprep.subr.bf16.mxu0 0
    %133 = vmatpush2.bf16.msra.mxu0 0
    %134 = vmatprep.subr.bf16.mxu0 0
    %135 = vmatpush2.bf16.msra.mxu0 0
    %136 = vmatprep.subr.bf16.mxu0 0
    %137 = vmatpush2.bf16.msra.mxu0 0
    %138 = vmatprep.subr.bf16.mxu0 0
    %139 = vmatpush2.bf16.msra.mxu0 0
    %140 = vmatprep.mubr.bf16.mxu0 0
    %141 = vmatmul.mubr.bf16.gmra.mxu0 %v96
    %v142 = vpop.f32.mrf.mxu0
    %v143 = vadd.f32 %v67, %v142
    %v144 = vpop.f32.mrf.mxu0
    %v145 = vadd.f32 %v67, %v144
    %v146 = vpop.f32.mrf.mxu0
    %v147 = vadd.f32 %v72, %v146
    %v148 = vpop.f32.mrf.mxu0
    %v149 = vadd.f32 %v72, %v148
    %150 = vmatprep.mubr.bf16.mxu0 0
    %151 = vmatmul.mubr.bf16.gmra.mxu0 %v99
    %v152 = vpop.f32.mrf.mxu0
    %v153 = vadd.f32 %v77, %v152
    %v154 = vpop.f32.mrf.mxu0
    %v155 = vadd.f32 %v77, %v154
    %v156 = vpop.f32.mrf.mxu0
    %v157 = vadd.f32 %v82, %v156
    %v158 = vpop.f32.mrf.mxu0
    %v159 = vadd.f32 %v82, %v158
    %160 = vdwg.mxu0
    %v161 = vmax.f32 %v143, 0.0
    %v162 = vmax.f32 %v145, 0.0
    %v163 = vmax.f32 %v147, 0.0
    %v164 = vmax.f32 %v149, 0.0
    %v165 = vmax.f32 %v153, 0.0
    %v166 = vmax.f32 %v155, 0.0
    %v167 = vmax.f32 %v157, 0.0
    %v168 = vmax.f32 %v159, 0.0
    %169 = vmatprep.subr.mxu0 0.0
    %170 = vmatpush1.xpose.msra.mxu0 0.0
    %171 = vmatprep.subr.mxu0 0.0
    %172 = vmatpush1.xpose.msra.mxu0 0.0
    %173 = vmatprep.subr.mxu0 0.0
    %174 = vmatpush1.xpose.msra.mxu0 0.0
    %175 = vmatprep.subr.mxu0 0.0
    %176 = vmatpush1.xpose.msra.mxu0 0.0
    %177 = vmatprep.subr.mxu0 0.0
    %178 = vmatpush1.xpose.msra.mxu0 0.0
    %179 = vmatprep.subr.mxu0 0.0
    %180 = vmatpush1.xpose.msra.mxu0 0.0
    %181 = vmatprep.subr.mxu0 0.0
    %182 = vmatpush1.xpose.msra.mxu0 0.0
    %183 = vmatprep.subr.mxu0 0.0
    %184 = vmatpush1.xpose.msra.mxu0 0.0
    %185 = vmatprep.subr.mxu0 0.0
    %186 = vmatpush1.xpose.msra.mxu0 0.0
    %187 = vmatprep.subr.mxu0 0.0
    %188 = vmatpush1.xpose.msra.mxu0 0.0
    %189 = vmatprep.subr.mxu0 0.0
    %190 = vmatpush1.xpose.msra.mxu0 0.0
    %191 = vmatprep.subr.mxu0 0.0
    %192 = vmatpush1.xpose.msra.mxu0 0.0
    %193 = vmatprep.subr.mxu0 %v168
    %194 = vmatpush1.xpose.msra.mxu0 %v167
    %195 = vmatprep.subr.mxu0 %v166
    %196 = vmatpush1.xpose.msra.mxu0 %v165
    %197 = vmatprep.subr.mxu0 %v164
    %198 = vmatpush1.xpose.msra.mxu0 %v163
    %199 = vmatprep.subr.mxu0 %v162
    %200 = vmatpush1.xpose.msra.mxu0 %v161
    %201 = vmatprep.subr.mxu0 0.0
    %202 = vmatpush2.xpose.msra.mxu0 0.0
    %203 = vmatprep.subr.mxu0 0.0
    %204 = vmatpush2.xpose.msra.mxu0 0.0
    %205 = vmatprep.subr.mxu0 0.0
    %206 = vmatpush2.xpose.msra.mxu0 0.0
    %207 = vmatprep.subr.mxu0 0.0
    %208 = vmatpush2.xpose.msra.mxu0 0.0
    %209 = vmatprep.subr.mxu0 0.0
    %210 = vmatpush2.xpose.msra.mxu0 0.0
    %211 = vmatprep.subr.mxu0 0.0
    %212 = vmatpush2.xpose.msra.mxu0 0.0
    %213 = vmatprep.subr.mxu0 0.0
    %214 = vmatpush2.xpose.msra.mxu0 0.0
    %215 = vmatprep.subr.mxu0 0.0
    %216 = vmatpush2.xpose.msra.mxu0 0.0
    %217 = vmatprep.subr.mxu0 0.0
    %218 = vmatpush2.xpose.msra.mxu0 0.0
    %219 = vmatprep.subr.mxu0 0.0
    %220 = vmatpush2.xpose.msra.mxu0 0.0
    %221 = vmatprep.subr.mxu0 0.0
    %222 = vmatpush2.xpose.msra.mxu0 0.0
    %223 = vmatprep.subr.mxu0 0.0
    %224 = vmatpush2.xpose.msra.mxu0 0.0
    %225 = vmatprep.subr.mxu0 0.0
    %226 = vmatpush2.xpose.msra.mxu0 0.0
    %227 = vmatprep.subr.mxu0 0.0
    %228 = vmatpush2.xpose.msra.mxu0 0.0
    %229 = vmatprep.subr.mxu0 0.0
    %230 = vmatpush2.xpose.msra.mxu0 0.0
    %231 = vmatprep.subr.mxu0 0.0
    %232 = vmatpush2.xpose.msra.mxu0 0.0
    %233 = vmatprep.mubr.f32.mxu0 1.0
    %234 = vmatmul.mubr.f32.gmra.mxu0 1.0
    %v235 = vpop.f32.mrf.mxu0
    %v236 = vadd.f32 0.0, %v235
    %v237 = vpop.f32.mrf.mxu0
    %238 = vdwg.mxu0
    %v239 = vadd.f32 %v57, %v236
    %vm240 = vcmask 253952
    %241 = vst.msk [vmem:[#allocation2] sm:$0x1] %vm240, %v239
    %v242 = vld [vmem:[#allocation2 + $0x4] sm:$0x1]
    %v243 = vld [vmem:[%s1] sm:$0xff]
    %v245 = vcombine.high %v243, %v243
    %v247 = vpack.c.bf16 %v243, %v243
    %v248 = vpack.c.bf16 %v245, %v245
    %v250 = vsel %vm101, %v247, 0
    %v253 = vsel %vm101, %v248, 0
    %255 = vmatprep.subr.bf16.mxu0 0
    %256 = vmatpush1.bf16.msra.mxu0 0
    %257 = vmatprep.subr.bf16.mxu0 0
    %258 = vmatpush1.bf16.msra.mxu0 0
    %259 = vmatprep.subr.bf16.mxu0 0
    %260 = vmatpush1.bf16.msra.mxu0 0
    %261 = vmatprep.subr.bf16.mxu0 0
    %262 = vmatpush1.bf16.msra.mxu0 0
    %263 = vmatprep.subr.bf16.mxu0 0
    %264 = vmatpush1.bf16.msra.mxu0 0
    %265 = vmatprep.subr.bf16.mxu0 0
    %266 = vmatpush1.bf16.msra.mxu0 0
    %267 = vmatprep.subr.bf16.mxu0 0
    %268 = vmatpush1.bf16.msra.mxu0 0
    %269 = vmatprep.subr.bf16.mxu0 %v253
    %270 = vmatpush1.bf16.msra.mxu0 %v250
    %271 = vmatprep.subr.bf16.mxu0 0
    %272 = vmatpush2.bf16.msra.mxu0 0
    %273 = vmatprep.subr.bf16.mxu0 0
    %274 = vmatpush2.bf16.msra.mxu0 0
    %275 = vmatprep.subr.bf16.mxu0 0
    %276 = vmatpush2.bf16.msra.mxu0 0
    %277 = vmatprep.subr.bf16.mxu0 0
    %278 = vmatpush2.bf16.msra.mxu0 0
    %279 = vmatprep.subr.bf16.mxu0 0
    %280 = vmatpush2.bf16.msra.mxu0 0
    %281 = vmatprep.subr.bf16.mxu0 0
    %282 = vmatpush2.bf16.msra.mxu0 0
    %283 = vmatprep.subr.bf16.mxu0 0
    %284 = vmatpush2.bf16.msra.mxu0 0
    %285 = vmatprep.subr.bf16.mxu0 0
    %286 = vmatpush2.bf16.msra.mxu0 0
    %287 = vmatprep.mubr.bf16.mxu0 0
    %288 = vmatmul.mubr.bf16.gmra.mxu0 %v96
    %v289 = vpop.f32.mrf.mxu0
    %v290 = vadd.f32 %v67, %v289
    %v291 = vpop.f32.mrf.mxu0
    %v292 = vadd.f32 %v67, %v291
    %v293 = vpop.f32.mrf.mxu0
    %v294 = vadd.f32 %v72, %v293
    %v295 = vpop.f32.mrf.mxu0
    %v296 = vadd.f32 %v72, %v295
    %297 = vmatprep.mubr.bf16.mxu0 0
    %298 = vmatmul.mubr.bf16.gmra.mxu0 %v99
    %v299 = vpop.f32.mrf.mxu0
    %v300 = vadd.f32 %v77, %v299
    %v301 = vpop.f32.mrf.mxu0
    %v302 = vadd.f32 %v77, %v301
    %v303 = vpop.f32.mrf.mxu0
    %v304 = vadd.f32 %v82, %v303
    %v305 = vpop.f32.mrf.mxu0
    %v306 = vadd.f32 %v82, %v305
    %307 = vdwg.mxu0
    %v308 = vmax.f32 %v290, 0.0
    %v309 = vmax.f32 %v292, 0.0
    %v310 = vmax.f32 %v294, 0.0
    %v311 = vmax.f32 %v296, 0.0
    %v312 = vmax.f32 %v300, 0.0
    %v313 = vmax.f32 %v302, 0.0
    %v314 = vmax.f32 %v304, 0.0
    %v315 = vmax.f32 %v306, 0.0
    %316 = vmatprep.subr.mxu0 0.0
    %317 = vmatpush1.xpose.msra.mxu0 0.0
    %318 = vmatprep.subr.mxu0 0.0
    %319 = vmatpush1.xpose.msra.mxu0 0.0
    %320 = vmatprep.subr.mxu0 0.0
    %321 = vmatpush1.xpose.msra.mxu0 0.0
    %322 = vmatprep.subr.mxu0 0.0
    %323 = vmatpush1.xpose.msra.mxu0 0.0
    %324 = vmatprep.subr.mxu0 0.0
    %325 = vmatpush1.xpose.msra.mxu0 0.0
    %326 = vmatprep.subr.mxu0 0.0
    %327 = vmatpush1.xpose.msra.mxu0 0.0
    %328 = vmatprep.subr.mxu0 0.0
    %329 = vmatpush1.xpose.msra.mxu0 0.0
    %330 = vmatprep.subr.mxu0 0.0
    %331 = vmatpush1.xpose.msra.mxu0 0.0
    %332 = vmatprep.subr.mxu0 0.0
    %333 = vmatpush1.xpose.msra.mxu0 0.0
    %334 = vmatprep.subr.mxu0 0.0
    %335 = vmatpush1.xpose.msra.mxu0 0.0
    %336 = vmatprep.subr.mxu0 0.0
    %337 = vmatpush1.xpose.msra.mxu0 0.0
    %338 = vmatprep.subr.mxu0 0.0
    %339 = vmatpush1.xpose.msra.mxu0 0.0
    %340 = vmatprep.subr.mxu0 %v315
    %341 = vmatpush1.xpose.msra.mxu0 %v314
    %342 = vmatprep.subr.mxu0 %v313
    %343 = vmatpush1.xpose.msra.mxu0 %v312
    %344 = vmatprep.subr.mxu0 %v311
    %345 = vmatpush1.xpose.msra.mxu0 %v310
    %346 = vmatprep.subr.mxu0 %v309
    %347 = vmatpush1.xpose.msra.mxu0 %v308
    %348 = vmatprep.subr.mxu0 0.0
    %349 = vmatpush2.xpose.msra.mxu0 0.0
    %350 = vmatprep.subr.mxu0 0.0
    %351 = vmatpush2.xpose.msra.mxu0 0.0
    %352 = vmatprep.subr.mxu0 0.0
    %353 = vmatpush2.xpose.msra.mxu0 0.0
    %354 = vmatprep.subr.mxu0 0.0
    %355 = vmatpush2.xpose.msra.mxu0 0.0
    %356 = vmatprep.subr.mxu0 0.0
    %357 = vmatpush2.xpose.msra.mxu0 0.0
    %358 = vmatprep.subr.mxu0 0.0
    %359 = vmatpush2.xpose.msra.mxu0 0.0
    %360 = vmatprep.subr.mxu0 0.0
    %361 = vmatpush2.xpose.msra.mxu0 0.0
    %362 = vmatprep.subr.mxu0 0.0
    %363 = vmatpush2.xpose.msra.mxu0 0.0
    %364 = vmatprep.subr.mxu0 0.0
    %365 = vmatpush2.xpose.msra.mxu0 0.0
    %366 = vmatprep.subr.mxu0 0.0
    %367 = vmatpush2.xpose.msra.mxu0 0.0
    %368 = vmatprep.subr.mxu0 0.0
    %369 = vmatpush2.xpose.msra.mxu0 0.0
    %370 = vmatprep.subr.mxu0 0.0
    %371 = vmatpush2.xpose.msra.mxu0 0.0
    %372 = vmatprep.subr.mxu0 0.0
    %373 = vmatpush2.xpose.msra.mxu0 0.0
    %374 = vmatprep.subr.mxu0 0.0
    %375 = vmatpush2.xpose.msra.mxu0 0.0
    %376 = vmatprep.subr.mxu0 0.0
    %377 = vmatpush2.xpose.msra.mxu0 0.0
    %378 = vmatprep.subr.mxu0 0.0
    %379 = vmatpush2.xpose.msra.mxu0 0.0
    %380 = vmatprep.mubr.f32.mxu0 1.0
    %381 = vmatmul.mubr.f32.gmra.mxu0 1.0
    %v382 = vpop.f32.mrf.mxu0
    %v383 = vadd.f32 0.0, %v382
    %v384 = vpop.f32.mrf.mxu0
    %385 = vdwg.mxu0
    %v386 = vadd.f32 %v242, %v383
    %387 = vst.msk [vmem:[#allocation2 + $0x4] sm:$0x1] %vm240, %v386
    %v388 = vld [vmem:[#allocation2 + $0x1] sm:$0x1]
    %s389 = scalar_lea.vmem %s0, 8
    %v390 = vld [vmem:[%s389] sm:$0xff]
    %v392 = vcombine.high %v390, %v390
    %v394 = vpack.c.bf16 %v390, %v390
    %v395 = vpack.c.bf16 %v392, %v392
    %v397 = vsel %vm101, %v394, 0
    %v400 = vsel %vm101, %v395, 0
    %402 = vmatprep.subr.bf16.mxu0 0
    %403 = vmatpush1.bf16.msra.mxu0 0
    %404 = vmatprep.subr.bf16.mxu0 0
    %405 = vmatpush1.bf16.msra.mxu0 0
    %406 = vmatprep.subr.bf16.mxu0 0
    %407 = vmatpush1.bf16.msra.mxu0 0
    %408 = vmatprep.subr.bf16.mxu0 0
    %409 = vmatpush1.bf16.msra.mxu0 0
    %410 = vmatprep.subr.bf16.mxu0 0
    %411 = vmatpush1.bf16.msra.mxu0 0
    %412 = vmatprep.subr.bf16.mxu0 0
    %413 = vmatpush1.bf16.msra.mxu0 0
    %414 = vmatprep.subr.bf16.mxu0 0
    %415 = vmatpush1.bf16.msra.mxu0 0
    %416 = vmatprep.subr.bf16.mxu0 %v400
    %417 = vmatpush1.bf16.msra.mxu0 %v397
    %418 = vmatprep.subr.bf16.mxu0 0
    %419 = vmatpush2.bf16.msra.mxu0 0
    %420 = vmatprep.subr.bf16.mxu0 0
    %421 = vmatpush2.bf16.msra.mxu0 0
    %422 = vmatprep.subr.bf16.mxu0 0
    %423 = vmatpush2.bf16.msra.mxu0 0
    %424 = vmatprep.subr.bf16.mxu0 0
    %425 = vmatpush2.bf16.msra.mxu0 0
    %426 = vmatprep.subr.bf16.mxu0 0
    %427 = vmatpush2.bf16.msra.mxu0 0
    %428 = vmatprep.subr.bf16.mxu0 0
    %429 = vmatpush2.bf16.msra.mxu0 0
    %430 = vmatprep.subr.bf16.mxu0 0
    %431 = vmatpush2.bf16.msra.mxu0 0
    %432 = vmatprep.subr.bf16.mxu0 0
    %433 = vmatpush2.bf16.msra.mxu0 0
    %434 = vmatprep.mubr.bf16.mxu0 0
    %435 = vmatmul.mubr.bf16.gmra.mxu0 %v96
    %v436 = vpop.f32.mrf.mxu0
    %v437 = vadd.f32 %v67, %v436
    %v438 = vpop.f32.mrf.mxu0
    %v439 = vadd.f32 %v67, %v438
    %v440 = vpop.f32.mrf.mxu0
    %v441 = vadd.f32 %v72, %v440
    %v442 = vpop.f32.mrf.mxu0
    %v443 = vadd.f32 %v72, %v442
    %444 = vmatprep.mubr.bf16.mxu0 0
    %445 = vmatmul.mubr.bf16.gmra.mxu0 %v99
    %v446 = vpop.f32.mrf.mxu0
    %v447 = vadd.f32 %v77, %v446
    %v448 = vpop.f32.mrf.mxu0
    %v449 = vadd.f32 %v77, %v448
    %v450 = vpop.f32.mrf.mxu0
    %v451 = vadd.f32 %v82, %v450
    %v452 = vpop.f32.mrf.mxu0
    %v453 = vadd.f32 %v82, %v452
    %454 = vdwg.mxu0
    %v455 = vmax.f32 %v437, 0.0
    %v456 = vmax.f32 %v439, 0.0
    %v457 = vmax.f32 %v441, 0.0
    %v458 = vmax.f32 %v443, 0.0
    %v459 = vmax.f32 %v447, 0.0
    %v460 = vmax.f32 %v449, 0.0
    %v461 = vmax.f32 %v451, 0.0
    %v462 = vmax.f32 %v453, 0.0
    %463 = vmatprep.subr.mxu0 0.0
    %464 = vmatpush1.xpose.msra.mxu0 0.0
    %465 = vmatprep.subr.mxu0 0.0
    %466 = vmatpush1.xpose.msra.mxu0 0.0
    %467 = vmatprep.subr.mxu0 0.0
    %468 = vmatpush1.xpose.msra.mxu0 0.0
    %469 = vmatprep.subr.mxu0 0.0
    %470 = vmatpush1.xpose.msra.mxu0 0.0
    %471 = vmatprep.subr.mxu0 0.0
    %472 = vmatpush1.xpose.msra.mxu0 0.0
    %473 = vmatprep.subr.mxu0 0.0
    %474 = vmatpush1.xpose.msra.mxu0 0.0
    %475 = vmatprep.subr.mxu0 0.0
    %476 = vmatpush1.xpose.msra.mxu0 0.0
    %477 = vmatprep.subr.mxu0 0.0
    %478 = vmatpush1.xpose.msra.mxu0 0.0
    %479 = vmatprep.subr.mxu0 0.0
    %480 = vmatpush1.xpose.msra.mxu0 0.0
    %481 = vmatprep.subr.mxu0 0.0
    %482 = vmatpush1.xpose.msra.mxu0 0.0
    %483 = vmatprep.subr.mxu0 0.0
    %484 = vmatpush1.xpose.msra.mxu0 0.0
    %485 = vmatprep.subr.mxu0 0.0
    %486 = vmatpush1.xpose.msra.mxu0 0.0
    %487 = vmatprep.subr.mxu0 %v462
    %488 = vmatpush1.xpose.msra.mxu0 %v461
    %489 = vmatprep.subr.mxu0 %v460
    %490 = vmatpush1.xpose.msra.mxu0 %v459
    %491 = vmatprep.subr.mxu0 %v458
    %492 = vmatpush1.xpose.msra.mxu0 %v457
    %493 = vmatprep.subr.mxu0 %v456
    %494 = vmatpush1.xpose.msra.mxu0 %v455
    %495 = vmatprep.subr.mxu0 0.0
    %496 = vmatpush2.xpose.msra.mxu0 0.0
    %497 = vmatprep.subr.mxu0 0.0
    %498 = vmatpush2.xpose.msra.mxu0 0.0
    %499 = vmatprep.subr.mxu0 0.0
    %500 = vmatpush2.xpose.msra.mxu0 0.0
    %501 = vmatprep.subr.mxu0 0.0
    %502 = vmatpush2.xpose.msra.mxu0 0.0
    %503 = vmatprep.subr.mxu0 0.0
    %504 = vmatpush2.xpose.msra.mxu0 0.0
    %505 = vmatprep.subr.mxu0 0.0
    %506 = vmatpush2.xpose.msra.mxu0 0.0
    %507 = vmatprep.subr.mxu0 0.0
    %508 = vmatpush2.xpose.msra.mxu0 0.0
    %509 = vmatprep.subr.mxu0 0.0
    %510 = vmatpush2.xpose.msra.mxu0 0.0
    %511 = vmatprep.subr.mxu0 0.0
    %512 = vmatpush2.xpose.msra.mxu0 0.0
    %513 = vmatprep.subr.mxu0 0.0
    %514 = vmatpush2.xpose.msra.mxu0 0.0
    %515 = vmatprep.subr.mxu0 0.0
    %516 = vmatpush2.xpose.msra.mxu0 0.0
    %517 = vmatprep.subr.mxu0 0.0
    %518 = vmatpush2.xpose.msra.mxu0 0.0
    %519 = vmatprep.subr.mxu0 0.0
    %520 = vmatpush2.xpose.msra.mxu0 0.0
    %521 = vmatprep.subr.mxu0 0.0
    %522 = vmatpush2.xpose.msra.mxu0 0.0
    %523 = vmatprep.subr.mxu0 0.0
    %524 = vmatpush2.xpose.msra.mxu0 0.0
    %525 = vmatprep.subr.mxu0 0.0
    %526 = vmatpush2.xpose.msra.mxu0 0.0
    %527 = vmatprep.mubr.f32.mxu0 1.0
    %528 = vmatmul.mubr.f32.gmra.mxu0 1.0
    %v529 = vpop.f32.mrf.mxu0
    %v530 = vadd.f32 0.0, %v529
    %v531 = vpop.f32.mrf.mxu0
    %532 = vdwg.mxu0
    %v533 = vadd.f32 %v388, %v530
    %534 = vst.msk [vmem:[#allocation2 + $0x1] sm:$0x1] %vm240, %v533
    %v535 = vld [vmem:[#allocation2 + $0x5] sm:$0x1]
    %s536 = scalar_lea.vmem %s1, 8
    %v537 = vld [vmem:[%s536] sm:$0xff]
    %v539 = vcombine.high %v537, %v537
    %v541 = vpack.c.bf16 %v537, %v537
    %v542 = vpack.c.bf16 %v539, %v539
    %v544 = vsel %vm101, %v541, 0
    %v547 = vsel %vm101, %v542, 0
    %549 = vmatprep.subr.bf16.mxu0 0
    %550 = vmatpush1.bf16.msra.mxu0 0
    %551 = vmatprep.subr.bf16.mxu0 0
    %552 = vmatpush1.bf16.msra.mxu0 0
    %553 = vmatprep.subr.bf16.mxu0 0
    %554 = vmatpush1.bf16.msra.mxu0 0
    %555 = vmatprep.subr.bf16.mxu0 0
    %556 = vmatpush1.bf16.msra.mxu0 0
    %557 = vmatprep.subr.bf16.mxu0 0
    %558 = vmatpush1.bf16.msra.mxu0 0
    %559 = vmatprep.subr.bf16.mxu0 0
    %560 = vmatpush1.bf16.msra.mxu0 0
    %561 = vmatprep.subr.bf16.mxu0 0
    %562 = vmatpush1.bf16.msra.mxu0 0
    %563 = vmatprep.subr.bf16.mxu0 %v547
    %564 = vmatpush1.bf16.msra.mxu0 %v544
    %565 = vmatprep.subr.bf16.mxu0 0
    %566 = vmatpush2.bf16.msra.mxu0 0
    %567 = vmatprep.subr.bf16.mxu0 0
    %568 = vmatpush2.bf16.msra.mxu0 0
    %569 = vmatprep.subr.bf16.mxu0 0
    %570 = vmatpush2.bf16.msra.mxu0 0
    %571 = vmatprep.subr.bf16.mxu0 0
    %572 = vmatpush2.bf16.msra.mxu0 0
    %573 = vmatprep.subr.bf16.mxu0 0
    %574 = vmatpush2.bf16.msra.mxu0 0
    %575 = vmatprep.subr.bf16.mxu0 0
    %576 = vmatpush2.bf16.msra.mxu0 0
    %577 = vmatprep.subr.bf16.mxu0 0
    %578 = vmatpush2.bf16.msra.mxu0 0
    %579 = vmatprep.subr.bf16.mxu0 0
    %580 = vmatpush2.bf16.msra.mxu0 0
    %581 = vmatprep.mubr.bf16.mxu0 0
    %582 = vmatmul.mubr.bf16.gmra.mxu0 %v96
    %v583 = vpop.f32.mrf.mxu0
    %v584 = vadd.f32 %v67, %v583
    %v585 = vpop.f32.mrf.mxu0
    %v586 = vadd.f32 %v67, %v585
    %v587 = vpop.f32.mrf.mxu0
    %v588 = vadd.f32 %v72, %v587
    %v589 = vpop.f32.mrf.mxu0
    %v590 = vadd.f32 %v72, %v589
    %591 = vmatprep.mubr.bf16.mxu0 0
    %592 = vmatmul.mubr.bf16.gmra.mxu0 %v99
    %v593 = vpop.f32.mrf.mxu0
    %v594 = vadd.f32 %v77, %v593
    %v595 = vpop.f32.mrf.mxu0
    %v596 = vadd.f32 %v77, %v595
    %v597 = vpop.f32.mrf.mxu0
    %v598 = vadd.f32 %v82, %v597
    %v599 = vpop.f32.mrf.mxu0
    %v600 = vadd.f32 %v82, %v599
    %601 = vdwg.mxu0
    %v602 = vmax.f32 %v584, 0.0
    %v603 = vmax.f32 %v586, 0.0
    %v604 = vmax.f32 %v588, 0.0
    %v605 = vmax.f32 %v590, 0.0
    %v606 = vmax.f32 %v594, 0.0
    %v607 = vmax.f32 %v596, 0.0
    %v608 = vmax.f32 %v598, 0.0
    %v609 = vmax.f32 %v600, 0.0
    %610 = vmatprep.subr.mxu0 0.0
    %611 = vmatpush1.xpose.msra.mxu0 0.0
    %612 = vmatprep.subr.mxu0 0.0
    %613 = vmatpush1.xpose.msra.mxu0 0.0
    %614 = vmatprep.subr.mxu0 0.0
    %615 = vmatpush1.xpose.msra.mxu0 0.0
    %616 = vmatprep.subr.mxu0 0.0
    %617 = vmatpush1.xpose.msra.mxu0 0.0
    %618 = vmatprep.subr.mxu0 0.0
    %619 = vmatpush1.xpose.msra.mxu0 0.0
    %620 = vmatprep.subr.mxu0 0.0
    %621 = vmatpush1.xpose.msra.mxu0 0.0
    %622 = vmatprep.subr.mxu0 0.0
    %623 = vmatpush1.xpose.msra.mxu0 0.0
    %624 = vmatprep.subr.mxu0 0.0
    %625 = vmatpush1.xpose.msra.mxu0 0.0
    %626 = vmatprep.subr.mxu0 0.0
    %627 = vmatpush1.xpose.msra.mxu0 0.0
    %628 = vmatprep.subr.mxu0 0.0
    %629 = vmatpush1.xpose.msra.mxu0 0.0
    %630 = vmatprep.subr.mxu0 0.0
    %631 = vmatpush1.xpose.msra.mxu0 0.0
    %632 = vmatprep.subr.mxu0 0.0
    %633 = vmatpush1.xpose.msra.mxu0 0.0
    %634 = vmatprep.subr.mxu0 %v609
    %635 = vmatpush1.xpose.msra.mxu0 %v608
    %636 = vmatprep.subr.mxu0 %v607
    %637 = vmatpush1.xpose.msra.mxu0 %v606
    %638 = vmatprep.subr.mxu0 %v605
    %639 = vmatpush1.xpose.msra.mxu0 %v604
    %640 = vmatprep.subr.mxu0 %v603
    %641 = vmatpush1.xpose.msra.mxu0 %v602
    %642 = vmatprep.subr.mxu0 0.0
    %643 = vmatpush2.xpose.msra.mxu0 0.0
    %644 = vmatprep.subr.mxu0 0.0
    %645 = vmatpush2.xpose.msra.mxu0 0.0
    %646 = vmatprep.subr.mxu0 0.0
    %647 = vmatpush2.xpose.msra.mxu0 0.0
    %648 = vmatprep.subr.mxu0 0.0
    %649 = vmatpush2.xpose.msra.mxu0 0.0
    %650 = vmatprep.subr.mxu0 0.0
    %651 = vmatpush2.xpose.msra.mxu0 0.0
    %652 = vmatprep.subr.mxu0 0.0
    %653 = vmatpush2.xpose.msra.mxu0 0.0
    %654 = vmatprep.subr.mxu0 0.0
    %655 = vmatpush2.xpose.msra.mxu0 0.0
    %656 = vmatprep.subr.mxu0 0.0
    %657 = vmatpush2.xpose.msra.mxu0 0.0
    %658 = vmatprep.subr.mxu0 0.0
    %659 = vmatpush2.xpose.msra.mxu0 0.0
    %660 = vmatprep.subr.mxu0 0.0
    %661 = vmatpush2.xpose.msra.mxu0 0.0
    %662 = vmatprep.subr.mxu0 0.0
    %663 = vmatpush2.xpose.msra.mxu0 0.0
    %664 = vmatprep.subr.mxu0 0.0
    %665 = vmatpush2.xpose.msra.mxu0 0.0
    %666 = vmatprep.subr.mxu0 0.0
    %667 = vmatpush2.xpose.msra.mxu0 0.0
    %668 = vmatprep.subr.mxu0 0.0
    %669 = vmatpush2.xpose.msra.mxu0 0.0
    %670 = vmatprep.subr.mxu0 0.0
    %671 = vmatpush2.xpose.msra.mxu0 0.0
    %672 = vmatprep.subr.mxu0 0.0
    %673 = vmatpush2.xpose.msra.mxu0 0.0
    %674 = vmatprep.mubr.f32.mxu0 1.0
    %675 = vmatmul.mubr.f32.gmra.mxu0 1.0
    %v676 = vpop.f32.mrf.mxu0
    %v677 = vadd.f32 0.0, %v676
    %v678 = vpop.f32.mrf.mxu0
    %679 = vdwg.mxu0
    %v680 = vadd.f32 %v535, %v677
    %681 = vst.msk [vmem:[#allocation2 + $0x5] sm:$0x1] %vm240, %v680
    %v682 = vld [vmem:[#allocation2 + $0x2] sm:$0x1]
    %s683 = scalar_lea.vmem %s0, 16
    %v684 = vld [vmem:[%s683] sm:$0xff]
    %v686 = vcombine.high %v684, %v684
    %v688 = vpack.c.bf16 %v684, %v684
    %v689 = vpack.c.bf16 %v686, %v686
    %v691 = vsel %vm101, %v688, 0
    %v694 = vsel %vm101, %v689, 0
    %696 = vmatprep.subr.bf16.mxu0 0
    %697 = vmatpush1.bf16.msra.mxu0 0
    %698 = vmatprep.subr.bf16.mxu0 0
    %699 = vmatpush1.bf16.msra.mxu0 0
    %700 = vmatprep.subr.bf16.mxu0 0
    %701 = vmatpush1.bf16.msra.mxu0 0
    %702 = vmatprep.subr.bf16.mxu0 0
    %703 = vmatpush1.bf16.msra.mxu0 0
    %704 = vmatprep.subr.bf16.mxu0 0
    %705 = vmatpush1.bf16.msra.mxu0 0
    %706 = vmatprep.subr.bf16.mxu0 0
    %707 = vmatpush1.bf16.msra.mxu0 0
    %708 = vmatprep.subr.bf16.mxu0 0
    %709 = vmatpush1.bf16.msra.mxu0 0
    %710 = vmatprep.subr.bf16.mxu0 %v694
    %711 = vmatpush1.bf16.msra.mxu0 %v691
    %712 = vmatprep.subr.bf16.mxu0 0
    %713 = vmatpush2.bf16.msra.mxu0 0
    %714 = vmatprep.subr.bf16.mxu0 0
    %715 = vmatpush2.bf16.msra.mxu0 0
    %716 = vmatprep.subr.bf16.mxu0 0
    %717 = vmatpush2.bf16.msra.mxu0 0
    %718 = vmatprep.subr.bf16.mxu0 0
    %719 = vmatpush2.bf16.msra.mxu0 0
    %720 = vmatprep.subr.bf16.mxu0 0
    %721 = vmatpush2.bf16.msra.mxu0 0
    %722 = vmatprep.subr.bf16.mxu0 0
    %723 = vmatpush2.bf16.msra.mxu0 0
    %724 = vmatprep.subr.bf16.mxu0 0
    %725 = vmatpush2.bf16.msra.mxu0 0
    %726 = vmatprep.subr.bf16.mxu0 0
    %727 = vmatpush2.bf16.msra.mxu0 0
    %728 = vmatprep.mubr.bf16.mxu0 0
    %729 = vmatmul.mubr.bf16.gmra.mxu0 %v96
    %v730 = vpop.f32.mrf.mxu0
    %v731 = vadd.f32 %v67, %v730
    %v732 = vpop.f32.mrf.mxu0
    %v733 = vadd.f32 %v67, %v732
    %v734 = vpop.f32.mrf.mxu0
    %v735 = vadd.f32 %v72, %v734
    %v736 = vpop.f32.mrf.mxu0
    %v737 = vadd.f32 %v72, %v736
    %738 = vmatprep.mubr.bf16.mxu0 0
    %739 = vmatmul.mubr.bf16.gmra.mxu0 %v99
    %v740 = vpop.f32.mrf.mxu0
    %v741 = vadd.f32 %v77, %v740
    %v742 = vpop.f32.mrf.mxu0
    %v743 = vadd.f32 %v77, %v742
    %v744 = vpop.f32.mrf.mxu0
    %v745 = vadd.f32 %v82, %v744
    %v746 = vpop.f32.mrf.mxu0
    %v747 = vadd.f32 %v82, %v746
    %748 = vdwg.mxu0
    %v749 = vmax.f32 %v731, 0.0
    %v750 = vmax.f32 %v733, 0.0
    %v751 = vmax.f32 %v735, 0.0
    %v752 = vmax.f32 %v737, 0.0
    %v753 = vmax.f32 %v741, 0.0
    %v754 = vmax.f32 %v743, 0.0
    %v755 = vmax.f32 %v745, 0.0
    %v756 = vmax.f32 %v747, 0.0
    %757 = vmatprep.subr.mxu0 0.0
    %758 = vmatpush1.xpose.msra.mxu0 0.0
    %759 = vmatprep.subr.mxu0 0.0
    %760 = vmatpush1.xpose.msra.mxu0 0.0
    %761 = vmatprep.subr.mxu0 0.0
    %762 = vmatpush1.xpose.msra.mxu0 0.0
    %763 = vmatprep.subr.mxu0 0.0
    %764 = vmatpush1.xpose.msra.mxu0 0.0
    %765 = vmatprep.subr.mxu0 0.0
    %766 = vmatpush1.xpose.msra.mxu0 0.0
    %767 = vmatprep.subr.mxu0 0.0
    %768 = vmatpush1.xpose.msra.mxu0 0.0
    %769 = vmatprep.subr.mxu0 0.0
    %770 = vmatpush1.xpose.msra.mxu0 0.0
    %771 = vmatprep.subr.mxu0 0.0
    %772 = vmatpush1.xpose.msra.mxu0 0.0
    %773 = vmatprep.subr.mxu0 0.0
    %774 = vmatpush1.xpose.msra.mxu0 0.0
    %775 = vmatprep.subr.mxu0 0.0
    %776 = vmatpush1.xpose.msra.mxu0 0.0
    %777 = vmatprep.subr.mxu0 0.0
    %778 = vmatpush1.xpose.msra.mxu0 0.0
    %779 = vmatprep.subr.mxu0 0.0
    %780 = vmatpush1.xpose.msra.mxu0 0.0
    %781 = vmatprep.subr.mxu0 %v756
    %782 = vmatpush1.xpose.msra.mxu0 %v755
    %783 = vmatprep.subr.mxu0 %v754
    %784 = vmatpush1.xpose.msra.mxu0 %v753
    %785 = vmatprep.subr.mxu0 %v752
    %786 = vmatpush1.xpose.msra.mxu0 %v751
    %787 = vmatprep.subr.mxu0 %v750
    %788 = vmatpush1.xpose.msra.mxu0 %v749
    %789 = vmatprep.subr.mxu0 0.0
    %790 = vmatpush2.xpose.msra.mxu0 0.0
    %791 = vmatprep.subr.mxu0 0.0
    %792 = vmatpush2.xpose.msra.mxu0 0.0
    %793 = vmatprep.subr.mxu0 0.0
    %794 = vmatpush2.xpose.msra.mxu0 0.0
    %795 = vmatprep.subr.mxu0 0.0
    %796 = vmatpush2.xpose.msra.mxu0 0.0
    %797 = vmatprep.subr.mxu0 0.0
    %798 = vmatpush2.xpose.msra.mxu0 0.0
    %799 = vmatprep.subr.mxu0 0.0
    %800 = vmatpush2.xpose.msra.mxu0 0.0
    %801 = vmatprep.subr.mxu0 0.0
    %802 = vmatpush2.xpose.msra.mxu0 0.0
    %803 = vmatprep.subr.mxu0 0.0
    %804 = vmatpush2.xpose.msra.mxu0 0.0
    %805 = vmatprep.subr.mxu0 0.0
    %806 = vmatpush2.xpose.msra.mxu0 0.0
    %807 = vmatprep.subr.mxu0 0.0
    %808 = vmatpush2.xpose.msra.mxu0 0.0
    %809 = vmatprep.subr.mxu0 0.0
    %810 = vmatpush2.xpose.msra.mxu0 0.0
    %811 = vmatprep.subr.mxu0 0.0
    %812 = vmatpush2.xpose.msra.mxu0 0.0
    %813 = vmatprep.subr.mxu0 0.0
    %814 = vmatpush2.xpose.msra.mxu0 0.0
    %815 = vmatprep.subr.mxu0 0.0
    %816 = vmatpush2.xpose.msra.mxu0 0.0
    %817 = vmatprep.subr.mxu0 0.0
    %818 = vmatpush2.xpose.msra.mxu0 0.0
    %819 = vmatprep.subr.mxu0 0.0
    %820 = vmatpush2.xpose.msra.mxu0 0.0
    %821 = vmatprep.mubr.f32.mxu0 1.0
    %822 = vmatmul.mubr.f32.gmra.mxu0 1.0
    %v823 = vpop.f32.mrf.mxu0
    %v824 = vadd.f32 0.0, %v823
    %v825 = vpop.f32.mrf.mxu0
    %826 = vdwg.mxu0
    %v827 = vadd.f32 %v682, %v824
    %828 = vst.msk [vmem:[#allocation2 + $0x2] sm:$0x1] %vm240, %v827
    %v829 = vld [vmem:[#allocation2 + $0x6] sm:$0x1]
    %s830 = scalar_lea.vmem %s1, 16
    %v831 = vld [vmem:[%s830] sm:$0xff]
    %v833 = vcombine.high %v831, %v831
    %v835 = vpack.c.bf16 %v831, %v831
    %v836 = vpack.c.bf16 %v833, %v833
    %v838 = vsel %vm101, %v835, 0
    %v841 = vsel %vm101, %v836, 0
    %843 = vmatprep.subr.bf16.mxu0 0
    %844 = vmatpush1.bf16.msra.mxu0 0
    %845 = vmatprep.subr.bf16.mxu0 0
    %846 = vmatpush1.bf16.msra.mxu0 0
    %847 = vmatprep.subr.bf16.mxu0 0
    %848 = vmatpush1.bf16.msra.mxu0 0
    %849 = vmatprep.subr.bf16.mxu0 0
    %850 = vmatpush1.bf16.msra.mxu0 0
    %851 = vmatprep.subr.bf16.mxu0 0
    %852 = vmatpush1.bf16.msra.mxu0 0
    %853 = vmatprep.subr.bf16.mxu0 0
    %854 = vmatpush1.bf16.msra.mxu0 0
    %855 = vmatprep.subr.bf16.mxu0 0
    %856 = vmatpush1.bf16.msra.mxu0 0
    %857 = vmatprep.subr.bf16.mxu0 %v841
    %858 = vmatpush1.bf16.msra.mxu0 %v838
    %859 = vmatprep.subr.bf16.mxu0 0
    %860 = vmatpush2.bf16.msra.mxu0 0
    %861 = vmatprep.subr.bf16.mxu0 0
    %862 = vmatpush2.bf16.msra.mxu0 0
    %863 = vmatprep.subr.bf16.mxu0 0
    %864 = vmatpush2.bf16.msra.mxu0 0
    %865 = vmatprep.subr.bf16.mxu0 0
    %866 = vmatpush2.bf16.msra.mxu0 0
    %867 = vmatprep.subr.bf16.mxu0 0
    %868 = vmatpush2.bf16.msra.mxu0 0
    %869 = vmatprep.subr.bf16.mxu0 0
    %870 = vmatpush2.bf16.msra.mxu0 0
    %871 = vmatprep.subr.bf16.mxu0 0
    %872 = vmatpush2.bf16.msra.mxu0 0
    %873 = vmatprep.subr.bf16.mxu0 0
    %874 = vmatpush2.bf16.msra.mxu0 0
    %875 = vmatprep.mubr.bf16.mxu0 0
    %876 = vmatmul.mubr.bf16.gmra.mxu0 %v96
    %v877 = vpop.f32.mrf.mxu0
    %v878 = vadd.f32 %v67, %v877
    %v879 = vpop.f32.mrf.mxu0
    %v880 = vadd.f32 %v67, %v879
    %v881 = vpop.f32.mrf.mxu0
    %v882 = vadd.f32 %v72, %v881
    %v883 = vpop.f32.mrf.mxu0
    %v884 = vadd.f32 %v72, %v883
    %885 = vmatprep.mubr.bf16.mxu0 0
    %886 = vmatmul.mubr.bf16.gmra.mxu0 %v99
    %v887 = vpop.f32.mrf.mxu0
    %v888 = vadd.f32 %v77, %v887
    %v889 = vpop.f32.mrf.mxu0
    %v890 = vadd.f32 %v77, %v889
    %v891 = vpop.f32.mrf.mxu0
    %v892 = vadd.f32 %v82, %v891
    %v893 = vpop.f32.mrf.mxu0
    %v894 = vadd.f32 %v82, %v893
    %895 = vdwg.mxu0
    %v896 = vmax.f32 %v878, 0.0
    %v897 = vmax.f32 %v880, 0.0
    %v898 = vmax.f32 %v882, 0.0
    %v899 = vmax.f32 %v884, 0.0
    %v900 = vmax.f32 %v888, 0.0
    %v901 = vmax.f32 %v890, 0.0
    %v902 = vmax.f32 %v892, 0.0
    %v903 = vmax.f32 %v894, 0.0
    %904 = vmatprep.subr.mxu0 0.0
    %905 = vmatpush1.xpose.msra.mxu0 0.0
    %906 = vmatprep.subr.mxu0 0.0
    %907 = vmatpush1.xpose.msra.mxu0 0.0
    %908 = vmatprep.subr.mxu0 0.0
    %909 = vmatpush1.xpose.msra.mxu0 0.0
    %910 = vmatprep.subr.mxu0 0.0
    %911 = vmatpush1.xpose.msra.mxu0 0.0
    %912 = vmatprep.subr.mxu0 0.0
    %913 = vmatpush1.xpose.msra.mxu0 0.0
    %914 = vmatprep.subr.mxu0 0.0
    %915 = vmatpush1.xpose.msra.mxu0 0.0
    %916 = vmatprep.subr.mxu0 0.0
    %917 = vmatpush1.xpose.msra.mxu0 0.0
    %918 = vmatprep.subr.mxu0 0.0
    %919 = vmatpush1.xpose.msra.mxu0 0.0
    %920 = vmatprep.subr.mxu0 0.0
    %921 = vmatpush1.xpose.msra.mxu0 0.0
    %922 = vmatprep.subr.mxu0 0.0
    %923 = vmatpush1.xpose.msra.mxu0 0.0
    %924 = vmatprep.subr.mxu0 0.0
    %925 = vmatpush1.xpose.msra.mxu0 0.0
    %926 = vmatprep.subr.mxu0 0.0
    %927 = vmatpush1.xpose.msra.mxu0 0.0
    %928 = vmatprep.subr.mxu0 %v903
    %929 = vmatpush1.xpose.msra.mxu0 %v902
    %930 = vmatprep.subr.mxu0 %v901
    %931 = vmatpush1.xpose.msra.mxu0 %v900
    %932 = vmatprep.subr.mxu0 %v899
    %933 = vmatpush1.xpose.msra.mxu0 %v898
    %934 = vmatprep.subr.mxu0 %v897
    %935 = vmatpush1.xpose.msra.mxu0 %v896
    %936 = vmatprep.subr.mxu0 0.0
    %937 = vmatpush2.xpose.msra.mxu0 0.0
    %938 = vmatprep.subr.mxu0 0.0
    %939 = vmatpush2.xpose.msra.mxu0 0.0
    %940 = vmatprep.subr.mxu0 0.0
    %941 = vmatpush2.xpose.msra.mxu0 0.0
    %942 = vmatprep.subr.mxu0 0.0
    %943 = vmatpush2.xpose.msra.mxu0 0.0
    %944 = vmatprep.subr.mxu0 0.0
    %945 = vmatpush2.xpose.msra.mxu0 0.0
    %946 = vmatprep.subr.mxu0 0.0
    %947 = vmatpush2.xpose.msra.mxu0 0.0
    %948 = vmatprep.subr.mxu0 0.0
    %949 = vmatpush2.xpose.msra.mxu0 0.0
    %950 = vmatprep.subr.mxu0 0.0
    %951 = vmatpush2.xpose.msra.mxu0 0.0
    %952 = vmatprep.subr.mxu0 0.0
    %953 = vmatpush2.xpose.msra.mxu0 0.0
    %954 = vmatprep.subr.mxu0 0.0
    %955 = vmatpush2.xpose.msra.mxu0 0.0
    %956 = vmatprep.subr.mxu0 0.0
    %957 = vmatpush2.xpose.msra.mxu0 0.0
    %958 = vmatprep.subr.mxu0 0.0
    %959 = vmatpush2.xpose.msra.mxu0 0.0
    %960 = vmatprep.subr.mxu0 0.0
    %961 = vmatpush2.xpose.msra.mxu0 0.0
    %962 = vmatprep.subr.mxu0 0.0
    %963 = vmatpush2.xpose.msra.mxu0 0.0
    %964 = vmatprep.subr.mxu0 0.0
    %965 = vmatpush2.xpose.msra.mxu0 0.0
    %966 = vmatprep.subr.mxu0 0.0
    %967 = vmatpush2.xpose.msra.mxu0 0.0
    %968 = vmatprep.mubr.f32.mxu0 1.0
    %969 = vmatmul.mubr.f32.gmra.mxu0 1.0
    %v970 = vpop.f32.mrf.mxu0
    %v971 = vadd.f32 0.0, %v970
    %v972 = vpop.f32.mrf.mxu0
    %973 = vdwg.mxu0
    %v974 = vadd.f32 %v829, %v971
    %975 = vst.msk [vmem:[#allocation2 + $0x6] sm:$0x1] %vm240, %v974
    %v976 = vld [vmem:[#allocation2 + $0x3] sm:$0x1]
    %s977 = scalar_lea.vmem %s0, 24
    %v978 = vld [vmem:[%s977] sm:$0xff]
    %v980 = vcombine.high %v978, %v978
    %v982 = vpack.c.bf16 %v978, %v978
    %v983 = vpack.c.bf16 %v980, %v980
    %v985 = vsel %vm101, %v982, 0
    %v988 = vsel %vm101, %v983, 0
    %990 = vmatprep.subr.bf16.mxu0 0
    %991 = vmatpush1.bf16.msra.mxu0 0
    %992 = vmatprep.subr.bf16.mxu0 0
    %993 = vmatpush1.bf16.msra.mxu0 0
    %994 = vmatprep.subr.bf16.mxu0 0
    %995 = vmatpush1.bf16.msra.mxu0 0
    %996 = vmatprep.subr.bf16.mxu0 0
    %997 = vmatpush1.bf16.msra.mxu0 0
    %998 = vmatprep.subr.bf16.mxu0 0
    %999 = vmatpush1.bf16.msra.mxu0 0
    %1000 = vmatprep.subr.bf16.mxu0 0
    %1001 = vmatpush1.bf16.msra.mxu0 0
    %1002 = vmatprep.subr.bf16.mxu0 0
    %1003 = vmatpush1.bf16.msra.mxu0 0
    %1004 = vmatprep.subr.bf16.mxu0 %v988
    %1005 = vmatpush1.bf16.msra.mxu0 %v985
    %1006 = vmatprep.subr.bf16.mxu0 0
    %1007 = vmatpush2.bf16.msra.mxu0 0
    %1008 = vmatprep.subr.bf16.mxu0 0
    %1009 = vmatpush2.bf16.msra.mxu0 0
    %1010 = vmatprep.subr.bf16.mxu0 0
    %1011 = vmatpush2.bf16.msra.mxu0 0
    %1012 = vmatprep.subr.bf16.mxu0 0
    %1013 = vmatpush2.bf16.msra.mxu0 0
    %1014 = vmatprep.subr.bf16.mxu0 0
    %1015 = vmatpush2.bf16.msra.mxu0 0
    %1016 = vmatprep.subr.bf16.mxu0 0
    %1017 = vmatpush2.bf16.msra.mxu0 0
    %1018 = vmatprep.subr.bf16.mxu0 0
    %1019 = vmatpush2.bf16.msra.mxu0 0
    %1020 = vmatprep.subr.bf16.mxu0 0
    %1021 = vmatpush2.bf16.msra.mxu0 0
    %1022 = vmatprep.mubr.bf16.mxu0 0
    %1023 = vmatmul.mubr.bf16.gmra.mxu0 %v96
    %v1024 = vpop.f32.mrf.mxu0
    %v1025 = vadd.f32 %v67, %v1024
    %v1026 = vpop.f32.mrf.mxu0
    %v1027 = vadd.f32 %v67, %v1026
    %v1028 = vpop.f32.mrf.mxu0
    %v1029 = vadd.f32 %v72, %v1028
    %v1030 = vpop.f32.mrf.mxu0
    %v1031 = vadd.f32 %v72, %v1030
    %1032 = vmatprep.mubr.bf16.mxu0 0
    %1033 = vmatmul.mubr.bf16.gmra.mxu0 %v99
    %v1034 = vpop.f32.mrf.mxu0
    %v1035 = vadd.f32 %v77, %v1034
    %v1036 = vpop.f32.mrf.mxu0
    %v1037 = vadd.f32 %v77, %v1036
    %v1038 = vpop.f32.mrf.mxu0
    %v1039 = vadd.f32 %v82, %v1038
    %v1040 = vpop.f32.mrf.mxu0
    %v1041 = vadd.f32 %v82, %v1040
    %1042 = vdwg.mxu0
    %v1043 = vmax.f32 %v1025, 0.0
    %v1044 = vmax.f32 %v1027, 0.0
    %v1045 = vmax.f32 %v1029, 0.0
    %v1046 = vmax.f32 %v1031, 0.0
    %v1047 = vmax.f32 %v1035, 0.0
    %v1048 = vmax.f32 %v1037, 0.0
    %v1049 = vmax.f32 %v1039, 0.0
    %v1050 = vmax.f32 %v1041, 0.0
    %1051 = vmatprep.subr.mxu0 0.0
    %1052 = vmatpush1.xpose.msra.mxu0 0.0
    %1053 = vmatprep.subr.mxu0 0.0
    %1054 = vmatpush1.xpose.msra.mxu0 0.0
    %1055 = vmatprep.subr.mxu0 0.0
    %1056 = vmatpush1.xpose.msra.mxu0 0.0
    %1057 = vmatprep.subr.mxu0 0.0
    %1058 = vmatpush1.xpose.msra.mxu0 0.0
    %1059 = vmatprep.subr.mxu0 0.0
    %1060 = vmatpush1.xpose.msra.mxu0 0.0
    %1061 = vmatprep.subr.mxu0 0.0
    %1062 = vmatpush1.xpose.msra.mxu0 0.0
    %1063 = vmatprep.subr.mxu0 0.0
    %1064 = vmatpush1.xpose.msra.mxu0 0.0
    %1065 = vmatprep.subr.mxu0 0.0
    %1066 = vmatpush1.xpose.msra.mxu0 0.0
    %1067 = vmatprep.subr.mxu0 0.0
    %1068 = vmatpush1.xpose.msra.mxu0 0.0
    %1069 = vmatprep.subr.mxu0 0.0
    %1070 = vmatpush1.xpose.msra.mxu0 0.0
    %1071 = vmatprep.subr.mxu0 0.0
    %1072 = vmatpush1.xpose.msra.mxu0 0.0
    %1073 = vmatprep.subr.mxu0 0.0
    %1074 = vmatpush1.xpose.msra.mxu0 0.0
    %1075 = vmatprep.subr.mxu0 %v1050
    %1076 = vmatpush1.xpose.msra.mxu0 %v1049
    %1077 = vmatprep.subr.mxu0 %v1048
    %1078 = vmatpush1.xpose.msra.mxu0 %v1047
    %1079 = vmatprep.subr.mxu0 %v1046
    %1080 = vmatpush1.xpose.msra.mxu0 %v1045
    %1081 = vmatprep.subr.mxu0 %v1044
    %1082 = vmatpush1.xpose.msra.mxu0 %v1043
    %1083 = vmatprep.subr.mxu0 0.0
    %1084 = vmatpush2.xpose.msra.mxu0 0.0
    %1085 = vmatprep.subr.mxu0 0.0
    %1086 = vmatpush2.xpose.msra.mxu0 0.0
    %1087 = vmatprep.subr.mxu0 0.0
    %1088 = vmatpush2.xpose.msra.mxu0 0.0
    %1089 = vmatprep.subr.mxu0 0.0
    %1090 = vmatpush2.xpose.msra.mxu0 0.0
    %1091 = vmatprep.subr.mxu0 0.0
    %1092 = vmatpush2.xpose.msra.mxu0 0.0
    %1093 = vmatprep.subr.mxu0 0.0
    %1094 = vmatpush2.xpose.msra.mxu0 0.0
    %1095 = vmatprep.subr.mxu0 0.0
    %1096 = vmatpush2.xpose.msra.mxu0 0.0
    %1097 = vmatprep.subr.mxu0 0.0
    %1098 = vmatpush2.xpose.msra.mxu0 0.0
    %1099 = vmatprep.subr.mxu0 0.0
    %1100 = vmatpush2.xpose.msra.mxu0 0.0
    %1101 = vmatprep.subr.mxu0 0.0
    %1102 = vmatpush2.xpose.msra.mxu0 0.0
    %1103 = vmatprep.subr.mxu0 0.0
    %1104 = vmatpush2.xpose.msra.mxu0 0.0
    %1105 = vmatprep.subr.mxu0 0.0
    %1106 = vmatpush2.xpose.msra.mxu0 0.0
    %1107 = vmatprep.subr.mxu0 0.0
    %1108 = vmatpush2.xpose.msra.mxu0 0.0
    %1109 = vmatprep.subr.mxu0 0.0
    %1110 = vmatpush2.xpose.msra.mxu0 0.0
    %1111 = vmatprep.subr.mxu0 0.0
    %1112 = vmatpush2.xpose.msra.mxu0 0.0
    %1113 = vmatprep.subr.mxu0 0.0
    %1114 = vmatpush2.xpose.msra.mxu0 0.0
    %1115 = vmatprep.mubr.f32.mxu0 1.0
    %1116 = vmatmul.mubr.f32.gmra.mxu0 1.0
    %v1117 = vpop.f32.mrf.mxu0
    %v1118 = vadd.f32 0.0, %v1117
    %v1119 = vpop.f32.mrf.mxu0
    %1120 = vdwg.mxu0
    %v1121 = vadd.f32 %v976, %v1118
    %1122 = vst.msk [vmem:[#allocation2 + $0x3] sm:$0x1] %vm240, %v1121
    %v1123 = vld [vmem:[#allocation2 + $0x7] sm:$0x1]
    %s1124 = scalar_lea.vmem %s1, 24
    %v1125 = vld [vmem:[%s1124] sm:$0xff]
    %v1127 = vcombine.high %v1125, %v1125
    %v1129 = vpack.c.bf16 %v1125, %v1125
    %v1130 = vpack.c.bf16 %v1127, %v1127
    %v1132 = vsel %vm101, %v1129, 0
    %v1135 = vsel %vm101, %v1130, 0
    %1137 = vmatprep.subr.bf16.mxu0 0
    %1138 = vmatpush1.bf16.msra.mxu0 0
    %1139 = vmatprep.subr.bf16.mxu0 0
    %1140 = vmatpush1.bf16.msra.mxu0 0
    %1141 = vmatprep.subr.bf16.mxu0 0
    %1142 = vmatpush1.bf16.msra.mxu0 0
    %1143 = vmatprep.subr.bf16.mxu0 0
    %1144 = vmatpush1.bf16.msra.mxu0 0
    %1145 = vmatprep.subr.bf16.mxu0 0
    %1146 = vmatpush1.bf16.msra.mxu0 0
    %1147 = vmatprep.subr.bf16.mxu0 0
    %1148 = vmatpush1.bf16.msra.mxu0 0
    %1149 = vmatprep.subr.bf16.mxu0 0
    %1150 = vmatpush1.bf16.msra.mxu0 0
    %1151 = vmatprep.subr.bf16.mxu0 %v1135
    %1152 = vmatpush1.bf16.msra.mxu0 %v1132
    %1153 = vmatprep.subr.bf16.mxu0 0
    %1154 = vmatpush2.bf16.msra.mxu0 0
    %1155 = vmatprep.subr.bf16.mxu0 0
    %1156 = vmatpush2.bf16.msra.mxu0 0
    %1157 = vmatprep.subr.bf16.mxu0 0
    %1158 = vmatpush2.bf16.msra.mxu0 0
    %1159 = vmatprep.subr.bf16.mxu0 0
    %1160 = vmatpush2.bf16.msra.mxu0 0
    %1161 = vmatprep.subr.bf16.mxu0 0
    %1162 = vmatpush2.bf16.msra.mxu0 0
    %1163 = vmatprep.subr.bf16.mxu0 0
    %1164 = vmatpush2.bf16.msra.mxu0 0
    %1165 = vmatprep.subr.bf16.mxu0 0
    %1166 = vmatpush2.bf16.msra.mxu0 0
    %1167 = vmatprep.subr.bf16.mxu0 0
    %1168 = vmatpush2.bf16.msra.mxu0 0
    %1169 = vmatprep.mubr.bf16.mxu0 0
    %1170 = vmatmul.mubr.bf16.gmra.mxu0 %v96
    %v1171 = vpop.f32.mrf.mxu0
    %v1172 = vadd.f32 %v67, %v1171
    %v1173 = vpop.f32.mrf.mxu0
    %v1174 = vadd.f32 %v67, %v1173
    %v1175 = vpop.f32.mrf.mxu0
    %v1176 = vadd.f32 %v72, %v1175
    %v1177 = vpop.f32.mrf.mxu0
    %v1178 = vadd.f32 %v72, %v1177
    %1179 = vmatprep.mubr.bf16.mxu0 0
    %1180 = vmatmul.mubr.bf16.gmra.mxu0 %v99
    %v1181 = vpop.f32.mrf.mxu0
    %v1182 = vadd.f32 %v77, %v1181
    %v1183 = vpop.f32.mrf.mxu0
    %v1184 = vadd.f32 %v77, %v1183
    %v1185 = vpop.f32.mrf.mxu0
    %v1186 = vadd.f32 %v82, %v1185
    %v1187 = vpop.f32.mrf.mxu0
    %v1188 = vadd.f32 %v82, %v1187
    %1189 = vdwg.mxu0
    %v1190 = vmax.f32 %v1172, 0.0
    %v1191 = vmax.f32 %v1174, 0.0
    %v1192 = vmax.f32 %v1176, 0.0
    %v1193 = vmax.f32 %v1178, 0.0
    %v1194 = vmax.f32 %v1182, 0.0
    %v1195 = vmax.f32 %v1184, 0.0
    %v1196 = vmax.f32 %v1186, 0.0
    %v1197 = vmax.f32 %v1188, 0.0
    %1198 = vmatprep.subr.mxu0 0.0
    %1199 = vmatpush1.xpose.msra.mxu0 0.0
    %1200 = vmatprep.subr.mxu0 0.0
    %1201 = vmatpush1.xpose.msra.mxu0 0.0
    %1202 = vmatprep.subr.mxu0 0.0
    %1203 = vmatpush1.xpose.msra.mxu0 0.0
    %1204 = vmatprep.subr.mxu0 0.0
    %1205 = vmatpush1.xpose.msra.mxu0 0.0
    %1206 = vmatprep.subr.mxu0 0.0
    %1207 = vmatpush1.xpose.msra.mxu0 0.0
    %1208 = vmatprep.subr.mxu0 0.0
    %1209 = vmatpush1.xpose.msra.mxu0 0.0
    %1210 = vmatprep.subr.mxu0 0.0
    %1211 = vmatpush1.xpose.msra.mxu0 0.0
    %1212 = vmatprep.subr.mxu0 0.0
    %1213 = vmatpush1.xpose.msra.mxu0 0.0
    %1214 = vmatprep.subr.mxu0 0.0
    %1215 = vmatpush1.xpose.msra.mxu0 0.0
    %1216 = vmatprep.subr.mxu0 0.0
    %1217 = vmatpush1.xpose.msra.mxu0 0.0
    %1218 = vmatprep.subr.mxu0 0.0
    %1219 = vmatpush1.xpose.msra.mxu0 0.0
    %1220 = vmatprep.subr.mxu0 0.0
    %1221 = vmatpush1.xpose.msra.mxu0 0.0
    %1222 = vmatprep.subr.mxu0 %v1197
    %1223 = vmatpush1.xpose.msra.mxu0 %v1196
    %1224 = vmatprep.subr.mxu0 %v1195
    %1225 = vmatpush1.xpose.msra.mxu0 %v1194
    %1226 = vmatprep.subr.mxu0 %v1193
    %1227 = vmatpush1.xpose.msra.mxu0 %v1192
    %1228 = vmatprep.subr.mxu0 %v1191
    %1229 = vmatpush1.xpose.msra.mxu0 %v1190
    %1230 = vmatprep.subr.mxu0 0.0
    %1231 = vmatpush2.xpose.msra.mxu0 0.0
    %1232 = vmatprep.subr.mxu0 0.0
    %1233 = vmatpush2.xpose.msra.mxu0 0.0
    %1234 = vmatprep.subr.mxu0 0.0
    %1235 = vmatpush2.xpose.msra.mxu0 0.0
    %1236 = vmatprep.subr.mxu0 0.0
    %1237 = vmatpush2.xpose.msra.mxu0 0.0
    %1238 = vmatprep.subr.mxu0 0.0
    %1239 = vmatpush2.xpose.msra.mxu0 0.0
    %1240 = vmatprep.subr.mxu0 0.0
    %1241 = vmatpush2.xpose.msra.mxu0 0.0
    %1242 = vmatprep.subr.mxu0 0.0
    %1243 = vmatpush2.xpose.msra.mxu0 0.0
    %1244 = vmatprep.subr.mxu0 0.0
    %1245 = vmatpush2.xpose.msra.mxu0 0.0
    %1246 = vmatprep.subr.mxu0 0.0
    %1247 = vmatpush2.xpose.msra.mxu0 0.0
    %1248 = vmatprep.subr.mxu0 0.0
    %1249 = vmatpush2.xpose.msra.mxu0 0.0
    %1250 = vmatprep.subr.mxu0 0.0
    %1251 = vmatpush2.xpose.msra.mxu0 0.0
    %1252 = vmatprep.subr.mxu0 0.0
    %1253 = vmatpush2.xpose.msra.mxu0 0.0
    %1254 = vmatprep.subr.mxu0 0.0
    %1255 = vmatpush2.xpose.msra.mxu0 0.0
    %1256 = vmatprep.subr.mxu0 0.0
    %1257 = vmatpush2.xpose.msra.mxu0 0.0
    %1258 = vmatprep.subr.mxu0 0.0
    %1259 = vmatpush2.xpose.msra.mxu0 0.0
    %1260 = vmatprep.subr.mxu0 0.0
    %1261 = vmatpush2.xpose.msra.mxu0 0.0
    %1262 = vmatprep.mubr.f32.mxu0 1.0
    %1263 = vmatmul.mubr.f32.gmra.mxu0 1.0
    %v1264 = vpop.f32.mrf.mxu0
    %v1265 = vadd.f32 0.0, %v1264
    %v1266 = vpop.f32.mrf.mxu0
    %1267 = vdwg.mxu0
    %v1268 = vadd.f32 %v1123, %v1265
    %1269 = vst.msk [vmem:[#allocation2 + $0x7] sm:$0x1] %vm240, %v1268
    // Predicated region
    $region50: #{transfer_net_forward.1} parent=1 // pred_check
      %p1270 = pneg %p43
    $region51: #{transfer_net_forward.1} parent=1 // pred_check_branch
      %1272 = sbr.rel (%p1270) target = $region53
    $region52: #{transfer_net_forward.1} parent=1 // pred_region
      %v1273 = vld [vmem:[#allocation2] sm:$0xff]
      %v1274 = vmul.f32 %v1273, 0.00390625
      %v1275 = vpack.c.bf16 %v1274, %v1274
      %v1276 = vld [vmem:[%s4] sm:$0xf]
      %v1277 = vld [vmem:[%s4 + $0x4] sm:$0xf]
      %v1278 = vld [vmem:[%s4 + $0x8] sm:$0xf]
      %v1279 = vld [vmem:[%s4 + $0xc] sm:$0xf]
      %v1280 = vld [vmem:[%s5] sm:$0x1]
      %v1282 = vlaneseq
      %v1283 = vshrl.u32 %v1282, 7
      %v1284 = vsub.s32 0, %v1283
      %v1285 = vrot.slane %v1280, %v1284
      %v1291 = vunpack.c.l.b16 %v1276
      %v1292 = vunpack.c.l.b16 %v1277
      %v1293 = vunpack.c.l.b16 %v1278
      %v1294 = vunpack.c.l.b16 %v1279
      %v1295 = vpack.c.b16 %v1292, %v1291
      %v1296 = vpack.c.b16 %v1294, %v1293
      %vm1299 = vcmask 261120
      %v1301 = vsel %vm1299, %v1275, 0
      %1303 = vmatprep.subr.bf16.mxu0 0
      %1304 = vmatpush1.bf16.msra.mxu0 0
      %1305 = vmatprep.subr.bf16.mxu0 0
      %1306 = vmatpush1.bf16.msra.mxu0 0
      %1307 = vmatprep.subr.bf16.mxu0 0
      %1308 = vmatpush1.bf16.msra.mxu0 0
      %1309 = vmatprep.subr.bf16.mxu0 0
      %1310 = vmatpush1.bf16.msra.mxu0 0
      %1311 = vmatprep.subr.bf16.mxu0 0
      %1312 = vmatpush1.bf16.msra.mxu0 0
      %1313 = vmatprep.subr.bf16.mxu0 0
      %1314 = vmatpush1.bf16.msra.mxu0 0
      %1315 = vmatprep.subr.bf16.mxu0 0
      %1316 = vmatpush1.bf16.msra.mxu0 %v1296
      %1317 = vmatprep.subr.bf16.mxu0 0
      %1318 = vmatpush1.bf16.msra.mxu0 %v1295
      %1319 = vmatprep.subr.bf16.mxu0 0
      %1320 = vmatpush2.bf16.msra.mxu0 0
      %1321 = vmatprep.subr.bf16.mxu0 0
      %1322 = vmatpush2.bf16.msra.mxu0 0
      %1323 = vmatprep.subr.bf16.mxu0 0
      %1324 = vmatpush2.bf16.msra.mxu0 0
      %1325 = vmatprep.subr.bf16.mxu0 0
      %1326 = vmatpush2.bf16.msra.mxu0 0
      %1327 = vmatprep.subr.bf16.mxu0 0
      %1328 = vmatpush2.bf16.msra.mxu0 0
      %1329 = vmatprep.subr.bf16.mxu0 0
      %1330 = vmatpush2.bf16.msra.mxu0 0
      %1331 = vmatprep.subr.bf16.mxu0 0
      %1332 = vmatpush2.bf16.msra.mxu0 0
      %1333 = vmatprep.subr.bf16.mxu0 0
      %1334 = vmatpush2.bf16.msra.mxu0 0
      %1335 = vmatprep.mubr.bf16.mxu0 0
      %1336 = vmatmul.mubr.bf16.gmra.mxu0 %v1301
      %v1337 = vpop.f32.mrf.mxu0
      %v1338 = vadd.f32 %v1285, %v1337
      %v1339 = vpop.f32.mrf.mxu0
      %v1340 = vpop.f32.mrf.mxu0
      %v1341 = vpop.f32.mrf.mxu0
      %1342 = vdwg.mxu0
      %v1343 = vmax.f32 %v1338, 0.0
      %v1344 = vpack.c.bf16 %v1343, %v1343
      %v1345 = vld [vmem:[%s6] sm:$0xf]
      %v1346 = vld [vmem:[%s6 + $0x4] sm:$0xf]
      %v1347 = vld [vmem:[%s6 + $0x8] sm:$0xf]
      %v1348 = vld [vmem:[%s6 + $0xc] sm:$0xf]
      %v1349 = vld [vmem:[%s6 + $0x10] sm:$0xf]
      %v1350 = vld [vmem:[%s6 + $0x14] sm:$0xf]
      %v1351 = vld [vmem:[%s6 + $0x18] sm:$0xf]
      %v1352 = vld [vmem:[%s6 + $0x1c] sm:$0xf]
      %v1353 = vld [vmem:[%s6 + $0x20] sm:$0xf]
      %v1354 = vld [vmem:[%s6 + $0x24] sm:$0xf]
      %v1355 = vld [vmem:[%s6 + $0x28] sm:$0xf]
      %v1356 = vld [vmem:[%s6 + $0x2c] sm:$0xf]
      %v1357 = vld [vmem:[%s6 + $0x30] sm:$0xf]
      %v1358 = vld [vmem:[%s6 + $0x34] sm:$0xf]
      %v1359 = vld [vmem:[%s6 + $0x38] sm:$0xf]
      %v1360 = vld [vmem:[%s6 + $0x3c] sm:$0xf]
      %v1361 = vld [vmem:[%s7] sm:$0x1]
      %v1363 = vlaneseq
      %v1364 = vshrl.u32 %v1363, 7
      %v1365 = vsub.s32 0, %v1364
      %v1366 = vrot.slane %v1361, %v1365
      %v1384 = vunpack.c.l.b16 %v1345
      %v1385 = vunpack.c.l.b16 %v1346
      %v1386 = vunpack.c.l.b16 %v1347
      %v1387 = vunpack.c.l.b16 %v1348
      %v1388 = vunpack.c.l.b16 %v1349
      %v1389 = vunpack.c.l.b16 %v1350
      %v1390 = vunpack.c.l.b16 %v1351
      %v1391 = vunpack.c.l.b16 %v1352
      %v1392 = vunpack.c.l.b16 %v1353
      %v1393 = vunpack.c.l.b16 %v1354
      %v1394 = vunpack.c.l.b16 %v1355
      %v1395 = vunpack.c.l.b16 %v1356
      %v1396 = vunpack.c.l.b16 %v1357
      %v1397 = vunpack.c.l.b16 %v1358
      %v1398 = vunpack.c.l.b16 %v1359
      %v1399 = vunpack.c.l.b16 %v1360
      %v1400 = vpack.c.b16 %v1385, %v1384
      %v1401 = vpack.c.b16 %v1387, %v1386
      %v1402 = vpack.c.b16 %v1389, %v1388
      %v1403 = vpack.c.b16 %v1391, %v1390
      %v1404 = vpack.c.b16 %v1393, %v1392
      %v1405 = vpack.c.b16 %v1395, %v1394
      %v1406 = vpack.c.b16 %v1397, %v1396
      %v1407 = vpack.c.b16 %v1399, %v1398
      %1416 = vmatprep.subr.bf16.mxu0 0
      %1417 = vmatpush1.bf16.msra.mxu0 %v1407
      %1418 = vmatprep.subr.bf16.mxu0 0
      %1419 = vmatpush1.bf16.msra.mxu0 %v1406
      %1420 = vmatprep.subr.bf16.mxu0 0
      %1421 = vmatpush1.bf16.msra.mxu0 %v1405
      %1422 = vmatprep.subr.bf16.mxu0 0
      %1423 = vmatpush1.bf16.msra.mxu0 %v1404
      %1424 = vmatprep.subr.bf16.mxu0 0
      %1425 = vmatpush1.bf16.msra.mxu0 %v1403
      %1426 = vmatprep.subr.bf16.mxu0 0
      %1427 = vmatpush1.bf16.msra.mxu0 %v1402
      %1428 = vmatprep.subr.bf16.mxu0 0
      %1429 = vmatpush1.bf16.msra.mxu0 %v1401
      %1430 = vmatprep.subr.bf16.mxu0 0
      %1431 = vmatpush1.bf16.msra.mxu0 %v1400
      %1432 = vmatprep.subr.bf16.mxu0 0
      %1433 = vmatpush2.bf16.msra.mxu0 0
      %1434 = vmatprep.subr.bf16.mxu0 0
      %1435 = vmatpush2.bf16.msra.mxu0 0
      %1436 = vmatprep.subr.bf16.mxu0 0
      %1437 = vmatpush2.bf16.msra.mxu0 0
      %1438 = vmatprep.subr.bf16.mxu0 0
      %1439 = vmatpush2.bf16.msra.mxu0 0
      %1440 = vmatprep.subr.bf16.mxu0 0
      %1441 = vmatpush2.bf16.msra.mxu0 0
      %1442 = vmatprep.subr.bf16.mxu0 0
      %1443 = vmatpush2.bf16.msra.mxu0 0
      %1444 = vmatprep.subr.bf16.mxu0 0
      %1445 = vmatpush2.bf16.msra.mxu0 0
      %1446 = vmatprep.subr.bf16.mxu0 0
      %1447 = vmatpush2.bf16.msra.mxu0 0
      %1448 = vmatprep.mubr.bf16.mxu0 0
      %1449 = vmatmul.mubr.bf16.gmra.mxu0 %v1344
      %v1450 = vpop.f32.mrf.mxu0
      %v1451 = vadd.f32 %v1366, %v1450
      %v1452 = vpop.f32.mrf.mxu0
      %v1453 = vpop.f32.mrf.mxu0
      %v1454 = vpop.f32.mrf.mxu0
      %1455 = vdwg.mxu0
      %v1456 = vmax.f32 %v1451, 0.0
      %v1457 = vpack.c.bf16 %v1456, %v1456
      %v1458 = vld [vmem:[%s8] sm:$0xf]
      %v1459 = vld [vmem:[%s8 + $0x4] sm:$0xf]
      %v1460 = vld [vmem:[%s8 + $0x8] sm:$0xf]
      %v1461 = vld [vmem:[%s8 + $0xc] sm:$0xf]
      %v1462 = vld [vmem:[%s8 + $0x10] sm:$0xf]
      %v1463 = vld [vmem:[%s8 + $0x14] sm:$0xf]
      %v1464 = vld [vmem:[%s8 + $0x18] sm:$0xf]
      %v1465 = vld [vmem:[%s8 + $0x1c] sm:$0xf]
      %v1466 = vld [vmem:[%s9] sm:$0x1]
      %v1468 = vlaneseq
      %v1469 = vshrl.u32 %v1468, 7
      %v1470 = vsub.s32 0, %v1469
      %v1471 = vrot.slane %v1466, %v1470
      %v1481 = vunpack.c.l.b16 %v1458
      %v1482 = vunpack.c.l.b16 %v1459
      %v1483 = vunpack.c.l.b16 %v1460
      %v1484 = vunpack.c.l.b16 %v1461
      %v1485 = vunpack.c.l.b16 %v1462
      %v1486 = vunpack.c.l.b16 %v1463
      %v1487 = vunpack.c.l.b16 %v1464
      %v1488 = vunpack.c.l.b16 %v1465
      %v1489 = vpack.c.b16 %v1482, %v1481
      %v1490 = vpack.c.b16 %v1484, %v1483
      %v1491 = vpack.c.b16 %v1486, %v1485
      %v1492 = vpack.c.b16 %v1488, %v1487
      %vm1497 = vcmask 523264
      %v1499 = vsel %vm1497, %v1457, 0
      %1501 = vmatprep.subr.bf16.mxu0 0
      %1502 = vmatpush1.bf16.msra.mxu0 0
      %1503 = vmatprep.subr.bf16.mxu0 0
      %1504 = vmatpush1.bf16.msra.mxu0 0
      %1505 = vmatprep.subr.bf16.mxu0 0
      %1506 = vmatpush1.bf16.msra.mxu0 0
      %1507 = vmatprep.subr.bf16.mxu0 0
      %1508 = vmatpush1.bf16.msra.mxu0 0
      %1509 = vmatprep.subr.bf16.mxu0 0
      %1510 = vmatpush1.bf16.msra.mxu0 %v1492
      %1511 = vmatprep.subr.bf16.mxu0 0
      %1512 = vmatpush1.bf16.msra.mxu0 %v1491
      %1513 = vmatprep.subr.bf16.mxu0 0
      %1514 = vmatpush1.bf16.msra.mxu0 %v1490
      %1515 = vmatprep.subr.bf16.mxu0 0
      %1516 = vmatpush1.bf16.msra.mxu0 %v1489
      %1517 = vmatprep.subr.bf16.mxu0 0
      %1518 = vmatpush2.bf16.msra.mxu0 0
      %1519 = vmatprep.subr.bf16.mxu0 0
      %1520 = vmatpush2.bf16.msra.mxu0 0
      %1521 = vmatprep.subr.bf16.mxu0 0
      %1522 = vmatpush2.bf16.msra.mxu0 0
      %1523 = vmatprep.subr.bf16.mxu0 0
      %1524 = vmatpush2.bf16.msra.mxu0 0
      %1525 = vmatprep.subr.bf16.mxu0 0
      %1526 = vmatpush2.bf16.msra.mxu0 0
      %1527 = vmatprep.subr.bf16.mxu0 0
      %1528 = vmatpush2.bf16.msra.mxu0 0
      %1529 = vmatprep.subr.bf16.mxu0 0
      %1530 = vmatpush2.bf16.msra.mxu0 0
      %1531 = vmatprep.subr.bf16.mxu0 0
      %1532 = vmatpush2.bf16.msra.mxu0 0
      %1533 = vmatprep.mubr.bf16.mxu0 0
      %1534 = vmatmul.mubr.bf16.gmra.mxu0 %v1499
      %v1535 = vpop.f32.mrf.mxu0
      %v1536 = vadd.f32 %v1471, %v1535
      %v1537 = vpop.f32.mrf.mxu0
      %v1538 = vpop.f32.mrf.mxu0
      %v1539 = vpop.f32.mrf.mxu0
      %1540 = vdwg.mxu0
      %1541 = vst [vmem:[#allocation3] sm:$0xf] %v1536
      %v1543 = vsel %vm1497, %v1456, 0
      %1545 = vmatprep.subr.mxu0 0.0
      %1546 = vmatpush1.xpose.msra.mxu0 0.0
      %1547 = vmatprep.subr.mxu0 0.0
      %1548 = vmatpush1.xpose.msra.mxu0 0.0
      %1549 = vmatprep.subr.mxu0 0.0
      %1550 = vmatpush1.xpose.msra.mxu0 0.0
      %1551 = vmatprep.subr.mxu0 0.0
      %1552 = vmatpush1.xpose.msra.mxu0 0.0
      %1553 = vmatprep.subr.mxu0 0.0
      %1554 = vmatpush1.xpose.msra.mxu0 0.0
      %1555 = vmatprep.subr.mxu0 0.0
      %1556 = vmatpush1.xpose.msra.mxu0 0.0
      %1557 = vmatprep.subr.mxu0 0.0
      %1558 = vmatpush1.xpose.msra.mxu0 0.0
      %1559 = vmatprep.subr.mxu0 0.0
      %1560 = vmatpush1.xpose.msra.mxu0 0.0
      %1561 = vmatprep.subr.mxu0 0.0
      %1562 = vmatpush1.xpose.msra.mxu0 0.0
      %1563 = vmatprep.subr.mxu0 0.0
      %1564 = vmatpush1.xpose.msra.mxu0 0.0
      %1565 = vmatprep.subr.mxu0 0.0
      %1566 = vmatpush1.xpose.msra.mxu0 0.0
      %1567 = vmatprep.subr.mxu0 0.0
      %1568 = vmatpush1.xpose.msra.mxu0 0.0
      %1569 = vmatprep.subr.mxu0 0.0
      %1570 = vmatpush1.xpose.msra.mxu0 0.0
      %1571 = vmatprep.subr.mxu0 0.0
      %1572 = vmatpush1.xpose.msra.mxu0 0.0
      %1573 = vmatprep.subr.mxu0 0.0
      %1574 = vmatpush1.xpose.msra.mxu0 0.0
      %1575 = vmatprep.subr.mxu0 0.0
      %1576 = vmatpush1.xpose.msra.mxu0 %v1543
      %1577 = vmatprep.subr.mxu0 0.0
      %1578 = vmatpush2.xpose.msra.mxu0 0.0
      %1579 = vmatprep.subr.mxu0 0.0
      %1580 = vmatpush2.xpose.msra.mxu0 0.0
      %1581 = vmatprep.subr.mxu0 0.0
      %1582 = vmatpush2.xpose.msra.mxu0 0.0
      %1583 = vmatprep.subr.mxu0 0.0
      %1584 = vmatpush2.xpose.msra.mxu0 0.0
      %1585 = vmatprep.subr.mxu0 0.0
      %1586 = vmatpush2.xpose.msra.mxu0 0.0
      %1587 = vmatprep.subr.mxu0 0.0
      %1588 = vmatpush2.xpose.msra.mxu0 0.0
      %1589 = vmatprep.subr.mxu0 0.0
      %1590 = vmatpush2.xpose.msra.mxu0 0.0
      %1591 = vmatprep.subr.mxu0 0.0
      %1592 = vmatpush2.xpose.msra.mxu0 0.0
      %1593 = vmatprep.subr.mxu0 0.0
      %1594 = vmatpush2.xpose.msra.mxu0 0.0
      %1595 = vmatprep.subr.mxu0 0.0
      %1596 = vmatpush2.xpose.msra.mxu0 0.0
      %1597 = vmatprep.subr.mxu0 0.0
      %1598 = vmatpush2.xpose.msra.mxu0 0.0
      %1599 = vmatprep.subr.mxu0 0.0
      %1600 = vmatpush2.xpose.msra.mxu0 0.0
      %1601 = vmatprep.subr.mxu0 0.0
      %1602 = vmatpush2.xpose.msra.mxu0 0.0
      %1603 = vmatprep.subr.mxu0 0.0
      %1604 = vmatpush2.xpose.msra.mxu0 0.0
      %1605 = vmatprep.subr.mxu0 0.0
      %1606 = vmatpush2.xpose.msra.mxu0 0.0
      %1607 = vmatprep.subr.mxu0 0.0
      %1608 = vmatpush2.xpose.msra.mxu0 0.0
      %1609 = vmatprep.mubr.f32.mxu0 0.0
      %1610 = vmatmul.mubr.f32.gmra.mxu0 %v1543
      %v1611 = vpop.f32.mrf.mxu0
      %v1612 = vadd.f32 0.0, %v1611
      %v1613 = vpop.f32.mrf.mxu0
      %1614 = vdwg.mxu0
      %v1615 = vmul.f32 %v1456, %v1456
      %v1616 = vsel %vm1497, %v1615, 0.0
      %1617 = vadd.xlane.f32.xlu0 %v1616
      %v1618 = vpop.xlane.xlu0 %1617
      %1619 = vxpose.xlu0.b32.start [1/16] %v1618, 128
      %1620 = vxpose.xlu0.b32.cont [2/16] 0.0, 128
      %1621 = vxpose.xlu0.b32.cont [3/16] 0.0, 128
      %1622 = vxpose.xlu0.b32.cont [4/16] 0.0, 128
      %1623 = vxpose.xlu0.b32.cont [5/16] 0.0, 128
      %1624 = vxpose.xlu0.b32.cont [6/16] 0.0, 128
      %1625 = vxpose.xlu0.b32.cont [7/16] 0.0, 128
      %1626 = vxpose.xlu0.b32.cont [8/16] 0.0, 128
      %1627 = vxpose.xlu0.b32.cont [9/16] 0.0, 128
      %1628 = vxpose.xlu0.b32.cont [10/16] 0.0, 128
      %1629 = vxpose.xlu0.b32.cont [11/16] 0.0, 128
      %1630 = vxpose.xlu0.b32.cont [12/16] 0.0, 128
      %1631 = vxpose.xlu0.b32.cont [13/16] 0.0, 128
      %1632 = vxpose.xlu0.b32.cont [14/16] 0.0, 128
      %1633 = vxpose.xlu0.b32.cont [15/16] 0.0, 128
      %1634 = vxpose.xlu0.b32.end [16/16] 0.0, 128
      %v1635 = vpop.trf.xlu0
      %v1636 = vpop.trf.xlu0
      %v1637 = vpop.trf.xlu0
      %v1638 = vpop.trf.xlu0
      %v1639 = vpop.trf.xlu0
      %v1640 = vpop.trf.xlu0
      %v1641 = vpop.trf.xlu0
      %v1642 = vpop.trf.xlu0
      %v1643 = vpop.trf.xlu0
      %v1644 = vpop.trf.xlu0
      %v1645 = vpop.trf.xlu0
      %v1646 = vpop.trf.xlu0
      %v1647 = vpop.trf.xlu0
      %v1648 = vpop.trf.xlu0
      %v1649 = vpop.trf.xlu0
      %v1650 = vpop.trf.xlu0
      %v1651 = vlaneseq
      %v1652 = vshrl.u32 %v1651, 7
      %v1653 = vsub.s32 0, %v1652
      %v1654 = vrot.slane %v1635, %v1653
      %v1655 = vadd.f32 %v1618, %v1654
      %v1656 = vmul.f32 %v1612, 2.0
      %v1657 = vsub.f32 %v1655, %v1656
      %v1658 = vmax.f32 %v1657, 0.0
      %vm1659 = vcmask 64512
      %v1660 = vsel %vm1659, %v1658, 0.0
      %1661 = vadd.xlane.f32.xlu0 %v1660
      %v1662 = vpop.xlane.xlu0 %1661
      %v1663 = vrot.slane %v1662, 4
      %v1664 = vadd.f32 %v1662, %v1663
      %v1665 = vrot.slane %v1664, 2
      %v1666 = vadd.f32 %v1664, %v1665
      %v1667 = vrot.slane %v1666, 1
      %v1668 = vadd.f32 %v1666, %v1667
      %s1669 = vtos %v1668
      %v1670 = vstv %s1669
      %v1671 = vmul.f32 %v1670, 0.017857144
      %v1672 = vmax.f32 %v1671, 1e-12
      %v1673 = vmul.f32 %v1672, 4.0
      %v1674 = vsub.f32 0.0, %v1658
      %v1675 = vrcp.pop %v1673
      %v1676 = vmul.f32 %v1674, %v1675
      %v1677 = vmul.f32 %v1676, 1.442695
      %v1678 = vpow.pop %v1677
      %v1679 = vmul.f32 %v1678, %v1678
      %v1680 = vadd.f32 %v1678, %v1679
      %v1681 = vmul.f32 %v1679, %v1679
      %v1682 = vadd.f32 %v1680, %v1681
      %v1683 = vmul.f32 %v1681, %v1681
      %v1684 = vadd.f32 %v1682, %v1683
      %v1685 = vmul.f32 %v1683, %v1683
      %v1686 = vadd.f32 %v1684, %v1685
      %v1687 = vld [vmem:[%s10] sm:$0xff]
      %v1688 = vmul.f32 %v1686, %v1687
      %v1689 = vsel %vm1659, %v1688, 0.0
      %1690 = vadd.xlane.f32.xlu0 %v1689
      %v1691 = vpop.xlane.xlu0 %1690
      %v1692 = vrot.slane %v1691, 4
      %v1693 = vadd.f32 %v1691, %v1692
      %v1694 = vrot.slane %v1693, 2
      %v1695 = vadd.f32 %v1693, %v1694
      %v1696 = vrot.slane %v1695, 1
      %v1697 = vadd.f32 %v1695, %v1696
      %s1698 = vtos %v1697
      %v1699 = vstv %s1698
      %v1700 = vmul.f32 %v1699, 0.0625
      %vm1701 = vcmask 0
      %1702 = vst.msk [vmem:[#allocation5] sm:$0x1] %vm1701, %v1700
    $region53: #{transfer_net_forward.1} parent=1 // pred_fallthru
      _
    // Predicated region
    $region54: #{transfer_net_forward.1} parent=1 // pred_check
      _
    $region55: #{transfer_net_forward.1} parent=1 // pred_check_branch
      %1704 = sbr.rel (0) target = $region57
    $region56: #{transfer_net_forward.1} parent=1 // pred_region
      %s1706 = ssub.s32 64, 64
      %1707 = vsyncadd [#allocation4], %s1706
      %s1709 = sshll.u32 [#allocation3], 4
      %s1710 = int_to_ptr.vmem [resolvable:$true] %s1709
      %1712 = dma.vmem_to_hbm [thread:$0]  %s1710, 64, %s11, [#allocation4]
    $region57: #{transfer_net_forward.1} parent=1 // pred_fallthru
      _
    // Predicated region
    $region58: #{transfer_net_forward.1} parent=1 // pred_check
      _
    $region59: #{transfer_net_forward.1} parent=1 // pred_check_branch
      %1714 = sbr.rel (0) target = $region61
    $region60: #{transfer_net_forward.1} parent=1 // pred_region
      %s1716 = ssub.s32 16, 16
      %1717 = vsyncadd [#allocation6], %s1716
      %s1719 = sshll.u32 [#allocation5], 4
      %s1720 = int_to_ptr.vmem [resolvable:$true] %s1719
      %1722 = dma.vmem_to_hbm [thread:$0]  %s1720, 16, %s12, [#allocation6]
    $region61: #{transfer_net_forward.1} parent=1 // pred_fallthru
      _
    // Predicated region
    $region62: #{transfer_net_forward.1} parent=1 // pred_check
      _
    $region63: #{transfer_net_forward.1} parent=1 // pred_check_branch
      %1724 = sbr.rel (0) target = $region65
    $region64: #{transfer_net_forward.1} parent=1 // pred_region
      %1725 = dma.done [#allocation4], 64
    $region65: #{transfer_net_forward.1} parent=1 // pred_fallthru
      _
    // Predicated region
    $region66: #{transfer_net_forward.1} parent=1 // pred_check
      _
    $region67: #{transfer_net_forward.1} parent=1 // pred_check_branch
      %1727 = sbr.rel (0) target = $region69
    $region68: #{transfer_net_forward.1} parent=1 // pred_region
      %1728 = dma.done [#allocation6], 16
    $region69: #{transfer_net_forward.1} parent=1 // pred_fallthru
      _
    %1729 = vsyncpa [#allocation4], 1
    %1730 = vsyncpa [#allocation6], 1

</llo_original>
